<compile_context>
chip_gen: v7x
topology: tpu7x:2x2x1
jax: 0.10.0
libtpu: 0.0.40
codegen_flags: <defaults>
</compile_context>

<pallas_src>
import jax
import jax.numpy as jnp
from jax import lax
from jax.experimental import pallas as pl
from jax.experimental.pallas import tpu as pltpu


def _self_attention_kernel(gamma_ref, x_ref, wfg_ref, whv_ref, out_ref):
    # x_ref: (1, C, N); wfg_ref/whv_ref: (C, C); gamma_ref: (1,) in SMEM.
    x = x_ref[0]                                   # (C, N)
    wfg = wfg_ref[...]                             # (C, C) = wf^T @ wg
    whv = whv_ref[...]                             # (C, C) = wv @ wh

    C, N = x.shape

    # p[c, j] = sum_c' W_fg[c, c'] * x[c', j]   -> s[a, j] = sum_c x[c,a] p[c,j]
    p = jnp.dot(wfg, x, preferred_element_type=jnp.float32)    # (C, N)

    # Row-block the (N, N) attention matrix over its first index (the softmax
    # row axis) so s/e/beta never exceed (TQ, N) at a time.
    TQ = 128 if (N % 128 == 0) else N
    n_blk = N // TQ

    def body(b, xb_acc):
        a0 = pl.multiple_of(b * TQ, TQ)
        xq = x_ref[0, :, pl.ds(a0, TQ)]                        # (C, TQ)
        # s_blk[a, j] = sum_c xq[c, a] * p[c, j]   (contract C; no transpose)
        s_blk = lax.dot_general(
            xq, p, dimension_numbers=(((0,), (0,)), ((), ())),
            preferred_element_type=jnp.float32)                # (TQ, N)
        # softmax over last axis (torch dim=2) — exact, full row per block.
        s_max = jnp.max(s_blk, axis=-1, keepdims=True)
        e = jnp.exp(s_blk - s_max)
        beta_blk = e * pl.reciprocal(jnp.sum(e, axis=-1, keepdims=True),
                                     approx=True)              # (TQ, N)
        # xb[c, i] += sum_a xq[c, a] * beta_blk[a, i]   (beta used untransposed)
        return xb_acc + jnp.dot(xq, beta_blk,
                                preferred_element_type=jnp.float32)

    xb = lax.fori_loop(0, n_blk, body,
                       jnp.zeros((C, N), jnp.float32), unroll=True)

    # o[c, i] = sum_c' W_hv[c, c'] * xb[c', i]
    o = jnp.dot(whv, xb, preferred_element_type=jnp.float32)   # (C, N)

    out_ref[0] = gamma_ref[0] * o + x


def self_attention_2d(x_nchw, wf, wg, wh, wv, gamma):
    """x_nchw: (B, C, H, W) f32. wf/wg/wh: (d, C); wv: (C, d); gamma: (1,)."""
    B, C, H, W = x_nchw.shape
    N = H * W

    # NCHW -> (B, C, N) is a pure reshape (no transpose, no extra HBM pass).
    x_bcn = x_nchw.reshape(B, C, N)

    # Fold the d-bottleneck 1x1 convs into two (C, C) matrices (done once,
    # outside the kernel):  s = X^T (wf^T wg) X ,  o = (wv wh) (X beta).
    w_fg = jnp.dot(wf.T, wg)                       # (C, C)
    w_hv = jnp.dot(wv, wh)                         # (C, C)

    out_bcn = pl.pallas_call(
        _self_attention_kernel,
        out_shape=jax.ShapeDtypeStruct((B, C, N), jnp.float32),
        grid=(B,),
        in_specs=[
            pl.BlockSpec(memory_space=pltpu.SMEM),           # gamma (1,)
            pl.BlockSpec((1, C, N), lambda b: (b, 0, 0)),    # x (per batch)
            pl.BlockSpec((C, C), lambda b: (0, 0)),          # W_fg
            pl.BlockSpec((C, C), lambda b: (0, 0)),          # W_hv
        ],
        out_specs=pl.BlockSpec((1, C, N), lambda b: (b, 0, 0)),
        compiler_params=pltpu.CompilerParams(
            dimension_semantics=("parallel",)),              # megacore on v7x
    )(gamma, x_bcn, w_fg, w_hv)

    # (B, C, N) -> NCHW is again a pure reshape.
    return out_bcn.reshape(B, C, H, W)


def _reference(x_nchw, wf, wg, wh, wv, gamma):
    """Plain-JAX replica of the PyTorch forward for verification."""
    B, C, H, W = x_nchw.shape
    N = H * W
    xf = x_nchw.reshape(B, C, N)                         # (B, C, N)
    f = jnp.einsum("dc,bcn->bdn", wf, xf)                # (B, d, N)
    g = jnp.einsum("dc,bcn->bdn", wg, xf)
    h = jnp.einsum("dc,bcn->bdn", wh, xf)
    s = jnp.einsum("bdi,bdj->bij", f, g)                 # (B, N, N)
    beta = jax.nn.softmax(s, axis=2)
    v = jnp.einsum("bdj,bji->bdi", h, beta)              # (B, d, N)
    o = jnp.einsum("cd,bdn->bcn", wv, v)                 # (B, C, N)
    return (gamma[0] * o + xf).reshape(B, C, H, W)


if __name__ == "__main__":
    # Module config: in_channels=32, k=8  =>  bottleneck d = 32 // 8 = 4.
    B, C, H, W = 2, 32, 16, 16
    k = 8
    d = C // k

    key = jax.random.PRNGKey(0)
    kx, kf, kg, kh, kv = jax.random.split(key, 5)
    x = jax.random.normal(kx, (B, C, H, W), dtype=jnp.float32)
    # 1x1-conv weights (kernel_size=1, bias=False):
    # Conv2d(C, d, 1) weight (d, C, 1, 1) -> stored as (d, C); wv: (C, d).
    # TODO(synk): eq_lr / spectral_normalization reparameterize the weights
    # outside the forward math; the kernel consumes the effective weights.
    wf = 0.1 * jax.random.normal(kf, (d, C), dtype=jnp.float32)
    wg = 0.1 * jax.random.normal(kg, (d, C), dtype=jnp.float32)
    wh = 0.1 * jax.random.normal(kh, (d, C), dtype=jnp.float32)
    wv = 0.1 * jax.random.normal(kv, (C, d), dtype=jnp.float32)
    # nn.Parameter(torch.zeros(1)) -> gamma initialized to 0.
    gamma = jnp.zeros((1,), dtype=jnp.float32)

    out = self_attention_2d(x, wf, wg, wh, wv, gamma)
    out = jax.block_until_ready(out)

    # Sanity checks against the plain-JAX reference (nonzero gamma too).
    gamma_nz = jnp.array([0.7], dtype=jnp.float32)
    out_nz = jax.block_until_ready(self_attention_2d(x, wf, wg, wh, wv, gamma_nz))
    ref_nz = _reference(x, wf, wg, wh, wv, gamma_nz)

    assert out.shape == (B, C, H, W)
    assert jnp.allclose(out, x, atol=1e-6)                     # gamma == 0 path
    # approx reciprocal + folded-weight accumulation order => slightly looser.
    assert jnp.allclose(out_nz, ref_nz, atol=5e-3, rtol=5e-3)

    print("KERNEL_OK")
</pallas_src>

<mosaic_0001>
module attributes {stable_mosaic.version = 11 : i64} {
  func.func @_self_attention_kernel(%arg0: i32, %arg1: memref<1xf32, #tpu.memory_space<smem>>, %arg2: memref<1x32x256xf32, #tpu.memory_space<vmem>>, %arg3: memref<32x32xf32, #tpu.memory_space<vmem>>, %arg4: memref<32x32xf32, #tpu.memory_space<vmem>>, %arg5: memref<1x32x256xf32, #tpu.memory_space<vmem>>) attributes {dimension_semantics = [#tpu.dimension_semantics<parallel>], iteration_bounds = array<i64: 2>, scalar_prefetch = 0 : i64, scratch_operands = 0 : i64, tpu.core_type = #tpu.core_type<tc>, window_params = [{transform_indices = @transform_0, window_bounds = array<i64: 1>}, {transform_indices = @transform_1, window_bounds = array<i64: 1, 32, 256>}, {pipeline_mode = #tpu.pipeline_mode<synchronous>, transform_indices = @transform_2, window_bounds = array<i64: 32, 32>}, {pipeline_mode = #tpu.pipeline_mode<synchronous>, transform_indices = @transform_3, window_bounds = array<i64: 32, 32>}, {transform_indices = @transform_4, window_bounds = array<i64: 1, 32, 256>}]} {
    %c0 = arith.constant 0 : index
    %c0_0 = arith.constant 0 : index
    %c0_1 = arith.constant 0 : index
    %0 = vector.load %arg2[%c0, %c0_0, %c0_1] : memref<1x32x256xf32, #tpu.memory_space<vmem>>, vector<1x32x256xf32>
    %1 = vector.shape_cast %0 : vector<1x32x256xf32> to vector<32x256xf32>
    %c0_2 = arith.constant 0 : index
    %c0_3 = arith.constant 0 : index
    %2 = vector.load %arg3[%c0_2, %c0_3] : memref<32x32xf32, #tpu.memory_space<vmem>>, vector<32x32xf32>
    %c0_4 = arith.constant 0 : index
    %c0_5 = arith.constant 0 : index
    %3 = vector.load %arg4[%c0_4, %c0_5] : memref<32x32xf32, #tpu.memory_space<vmem>>, vector<32x32xf32>
    %cst = arith.constant dense<0.000000e+00> : vector<32x256xf32>
    %4 = tpu.matmul %2, %1, %cst {dimension_numbers = #tpu.dot_dimension_numbers<[1], [0], [0], [1], [0, 0, 1, 1], [], []>} : vector<32x32xf32>, vector<32x256xf32>, vector<32x256xf32> -> vector<32x256xf32>
    %cst_6 = arith.constant 0.000000e+00 : f32
    %5 = vector.broadcast %cst_6 : f32 to vector<32x256xf32>
    %c0_i32 = arith.constant 0 : i32
    %c128_i32 = arith.constant 128 : i32
    %6 = arith.muli %c0_i32, %c128_i32 : i32
    %7 = tpu.assume_multiple %6, 128 : i32
    %c0_7 = arith.constant 0 : index
    %c0_8 = arith.constant 0 : index
    %8 = arith.index_cast %7 : i32 to index
    %9 = vector.load %arg2[%c0_7, %c0_8, %8] : memref<1x32x256xf32, #tpu.memory_space<vmem>>, vector<1x32x128xf32>
    %10 = vector.shape_cast %9 : vector<1x32x128xf32> to vector<32x128xf32>
    %cst_9 = arith.constant dense<0.000000e+00> : vector<128x256xf32>
    %11 = tpu.matmul %10, %4, %cst_9 {dimension_numbers = #tpu.dot_dimension_numbers<[0], [0], [1], [1], [0, 1, 1, 1], [], []>} : vector<32x128xf32>, vector<32x256xf32>, vector<128x256xf32> -> vector<128x256xf32>
    %cst_10 = arith.constant dense<0xFF800000> : vector<128xf32>
    %12 = vector.multi_reduction <maximumf>, %11, %cst_10 [1] : vector<128x256xf32> to vector<128xf32>
    %13 = vector.shape_cast %12 : vector<128xf32> to vector<128x1xf32>
    %14 = vector.broadcast %13 : vector<128x1xf32> to vector<128x256xf32>
    %15 = arith.subf %11, %14 : vector<128x256xf32>
    %16 = math.exp %15 : vector<128x256xf32>
    %cst_11 = arith.constant dense<0.000000e+00> : vector<128xf32>
    %17 = vector.multi_reduction <add>, %16, %cst_11 [1] : vector<128x256xf32> to vector<128xf32>
    %18 = vector.shape_cast %17 : vector<128xf32> to vector<128x1xf32>
    %19 = tpu.reciprocal %18 {approx = true} : vector<128x1xf32> -> vector<128x1xf32>
    %20 = vector.broadcast %19 : vector<128x1xf32> to vector<128x256xf32>
    %21 = arith.mulf %16, %20 : vector<128x256xf32>
    %cst_12 = arith.constant dense<0.000000e+00> : vector<32x256xf32>
    %22 = tpu.matmul %10, %21, %cst_12 {dimension_numbers = #tpu.dot_dimension_numbers<[1], [0], [0], [1], [0, 0, 1, 1], [], []>} : vector<32x128xf32>, vector<128x256xf32>, vector<32x256xf32> -> vector<32x256xf32>
    %23 = arith.addf %5, %22 : vector<32x256xf32>
    %c1_i32 = arith.constant 1 : i32
    %c128_i32_13 = arith.constant 128 : i32
    %24 = arith.muli %c1_i32, %c128_i32_13 : i32
    %25 = tpu.assume_multiple %24, 128 : i32
    %c0_14 = arith.constant 0 : index
    %c0_15 = arith.constant 0 : index
    %26 = arith.index_cast %25 : i32 to index
    %27 = vector.load %arg2[%c0_14, %c0_15, %26] : memref<1x32x256xf32, #tpu.memory_space<vmem>>, vector<1x32x128xf32>
    %28 = vector.shape_cast %27 : vector<1x32x128xf32> to vector<32x128xf32>
    %cst_16 = arith.constant dense<0.000000e+00> : vector<128x256xf32>
    %29 = tpu.matmul %28, %4, %cst_16 {dimension_numbers = #tpu.dot_dimension_numbers<[0], [0], [1], [1], [0, 1, 1, 1], [], []>} : vector<32x128xf32>, vector<32x256xf32>, vector<128x256xf32> -> vector<128x256xf32>
    %cst_17 = arith.constant dense<0xFF800000> : vector<128xf32>
    %30 = vector.multi_reduction <maximumf>, %29, %cst_17 [1] : vector<128x256xf32> to vector<128xf32>
    %31 = vector.shape_cast %30 : vector<128xf32> to vector<128x1xf32>
    %32 = vector.broadcast %31 : vector<128x1xf32> to vector<128x256xf32>
    %33 = arith.subf %29, %32 : vector<128x256xf32>
    %34 = math.exp %33 : vector<128x256xf32>
    %cst_18 = arith.constant dense<0.000000e+00> : vector<128xf32>
    %35 = vector.multi_reduction <add>, %34, %cst_18 [1] : vector<128x256xf32> to vector<128xf32>
    %36 = vector.shape_cast %35 : vector<128xf32> to vector<128x1xf32>
    %37 = tpu.reciprocal %36 {approx = true} : vector<128x1xf32> -> vector<128x1xf32>
    %38 = vector.broadcast %37 : vector<128x1xf32> to vector<128x256xf32>
    %39 = arith.mulf %34, %38 : vector<128x256xf32>
    %cst_19 = arith.constant dense<0.000000e+00> : vector<32x256xf32>
    %40 = tpu.matmul %28, %39, %cst_19 {dimension_numbers = #tpu.dot_dimension_numbers<[1], [0], [0], [1], [0, 0, 1, 1], [], []>} : vector<32x128xf32>, vector<128x256xf32>, vector<32x256xf32> -> vector<32x256xf32>
    %41 = arith.addf %23, %40 : vector<32x256xf32>
    %c2_i32 = arith.constant 2 : i32
    %cst_20 = arith.constant dense<0.000000e+00> : vector<32x256xf32>
    %42 = tpu.matmul %3, %41, %cst_20 {dimension_numbers = #tpu.dot_dimension_numbers<[1], [0], [0], [1], [0, 0, 1, 1], [], []>} : vector<32x32xf32>, vector<32x256xf32>, vector<32x256xf32> -> vector<32x256xf32>
    %c0_21 = arith.constant 0 : index
    %43 = memref.load %arg1[%c0_21] : memref<1xf32, #tpu.memory_space<smem>>
    %44 = vector.broadcast %43 : f32 to vector<32x256xf32>
    %45 = arith.mulf %44, %42 : vector<32x256xf32>
    %46 = arith.addf %45, %1 : vector<32x256xf32>
    %c0_22 = arith.constant 0 : index
    %c0_23 = arith.constant 0 : index
    %c0_24 = arith.constant 0 : index
    %47 = vector.load %arg5[%c0_22, %c0_23, %c0_24] : memref<1x32x256xf32, #tpu.memory_space<vmem>>, vector<1x32x256xf32>
    %48 = vector.shape_cast %47 : vector<1x32x256xf32> to vector<32x256xf32>
    %49 = vector.shape_cast %46 : vector<32x256xf32> to vector<1x32x256xf32>
    tpu.vector_store %arg5[%c0_22, %c0_23, %c0_24], %49 {strides = array<i32>} : memref<1x32x256xf32, #tpu.memory_space<vmem>>, vector<1x32x256xf32>,
    return
  }
  func.func @transform_0(%arg0: i32) -> i32 {
    %c0_i32 = arith.constant 0 : i32
    %c0_i32_0 = arith.constant 0 : i32
    return %c0_i32 : i32
  }
  func.func @transform_1(%arg0: i32) -> (i32, i32, i32) {
    %c0_i32 = arith.constant 0 : i32
    %c0_i32_0 = arith.constant 0 : i32
    %c0_i32_1 = arith.constant 0 : i32
    return %arg0, %c0_i32, %c0_i32_0 : i32, i32, i32
  }
  func.func @transform_2(%arg0: i32) -> (i32, i32) {
    %c0_i32 = arith.constant 0 : i32
    %c0_i32_0 = arith.constant 0 : i32
    %c0_i32_1 = arith.constant 0 : i32
    return %c0_i32, %c0_i32_0 : i32, i32
  }
  func.func @transform_3(%arg0: i32) -> (i32, i32) {
    %c0_i32 = arith.constant 0 : i32
    %c0_i32_0 = arith.constant 0 : i32
    %c0_i32_1 = arith.constant 0 : i32
    return %c0_i32, %c0_i32_0 : i32, i32
  }
  func.func @transform_4(%arg0: i32) -> (i32, i32, i32) {
    %c0_i32 = arith.constant 0 : i32
    %c0_i32_0 = arith.constant 0 : i32
    %c0_i32_1 = arith.constant 0 : i32
    return %arg0, %c0_i32, %c0_i32_0 : i32, i32, i32
  }
}

</mosaic_0001>

<llo_original>
// kernel: tpu_custom_call.1
$region0: #{tpu_custom_call.1}
  #allocation0 [shape = 'u32[]', space=smem, size = 0x4, offset = 0x4, fixed_abs, tag = 'smem constant byte address 0x4 - core index']
  #allocation1 [shape = 'u32[144,128]{1,0:T(1,128)}', space=vmem, size = 0x12000, scoped, tag = 'internal scratch']
  #allocation2 [shape = 'f32[1]{0:T(128)S(6)}', space=smem, size = 0x200, scoped, tag = 'scoped memory for tpu_custom_call.1']
  %s0 = inlined_call_operand.<no memory space> [shape: f32[1], index: 0, kind: input, shape index: {}]
  %s1 = inlined_call_operand.hbm [shape: f32[2,32,256], index: 1, kind: input, shape index: {}]
  %s2 = inlined_call_operand.hbm [shape: f32[32,32], index: 2, kind: input, shape index: {}]
  %s3 = inlined_call_operand.hbm [shape: f32[32,32], index: 3, kind: input, shape index: {}]
  %s4 = inlined_call_operand.hbm [shape: f32[2,32,256], index: 4, kind: output, shape index: {}]
  %s5 = sld [smem:[#allocation0]]
  $region61: #{tpu_custom_call.1} parent=0
    _
  %s7 = ssub.s32 1, %s5
  %s8 = scalar_select 0, %s7, %s5
  %9 = sst [smem:[#allocation2]] %s0
  $region1: #{tpu_custom_call.1} parent=0
    #allocation3 [shape = 'u8[65536]{0}', space=vmem, size = 0x10000, scoped, tag = 'input window, operand 1']
    #allocation4 [shape = 's32[2]{0}', space=sflag, size = 0x8, scoped, tag = 'scoped memory for tpu_custom_call.1']
    #allocation5 [shape = 's32[2]{0}', space=sflag, size = 0x8, scoped, tag = 'scoped memory for tpu_custom_call.1']
    #allocation6 [shape = 'u8[16384]{0}', space=vmem, size = 0x4000, scoped, tag = 'input window, operand 2, single buffered']
    #allocation7 [shape = 's32[1]{0}', space=sflag, size = 0x4, scoped, tag = 'scoped memory for tpu_custom_call.1']
    #allocation8 [shape = 'u8[16384]{0}', space=vmem, size = 0x4000, scoped, tag = 'input window, operand 3, single buffered']
    #allocation9 [shape = 'u8[65536]{0}', space=vmem, size = 0x10000, scoped, tag = 'output window, operand 0']
    %10 = vsyncpa [#allocation4], 0
    %s11 = scalar_lea.sflag [#allocation4], 1
    %12 = vsyncpa %s11, 0
    %13 = vsyncpa [#allocation7], 0
    %14 = vsyncpa [#allocation5], 0
    %s15 = scalar_lea.sflag [#allocation5], 1
    %16 = vsyncpa %s15, 0
    loop: start=0, step=1, limit=4
    $region2: #{tpu_custom_call.1} parent=1 // loop_pre_header
      _
    $region3: #{tpu_custom_call.1} parent=1 // loop_header
      %s18 = sphi 0, %s22
      %p19 = scmp.ge.s32.totalorder %s18, 4
      %s26 = sphi 0, %s26
      %s28 = sphi 0, %s26
      %s29 = sphi 0, %s28
      %s43 = sphi 0, %s29
      %s49 = sphi 0, %s51
      %s52 = sphi 0, %s49
      %s53 = sphi 0, %s52
      %s69 = sphi 0, %s53
      %s73 = sphi 0, %s73
      %s75 = sphi 0, %s73
      %s76 = sphi 0, %s75
      %s90 = sphi 0, %s76
      %s94 = sphi 0, %s94
      %s96 = sphi 0, %s94
      %s97 = sphi 0, %s96
      %s111 = sphi 0, %s97
      %s117 = sphi 0, %s119
      %s120 = sphi 0, %s117
      %s121 = sphi 0, %s120
      %s137 = sphi 0, %s121
    $region4: #{tpu_custom_call.1} parent=1 // loop_header_branch
      %21 = sbr.rel (%p19) target = $region8
    $region5: #{tpu_custom_call.1} parent=1 // loop_body
      %s23 = ssub.s32 %s18, 1
      %s24 = ssub.s32 %s18, 2
      %s25 = sadd.s32 %s18, 1
      %s27 = sadd.s32 %s26, 1
      %p30 = scmp.eq.s32.totalorder %s18, 1
      %p31 = scmp.ne.s32.totalorder %s26, %s28
      %p32 = scmp.eq.s32.totalorder %s18, 0
      %p33 = por %p31, %p32
      %p34 = scmp.ne.s32.totalorder %s26, %s28
      %p35 = scmp.eq.s32.totalorder %s23, 1
      %p36 = por %p34, %p35
      %p37 = scmp.ne.s32.totalorder %s28, %s29
      %p38 = scmp.eq.s32.totalorder %s23, 0
      %p39 = por %p37, %p38
      %p40 = scmp.ne.s32.totalorder %s28, %s29
      %p41 = scmp.eq.s32.totalorder %s24, 1
      %p42 = por %p40, %p41
      %p44 = scmp.ne.s32.totalorder %s29, %s43
      %p45 = scmp.eq.s32.totalorder %s24, 0
      %p46 = por %p44, %p45
      %s47 = ssub.s32 %s18, %s25
      %p48 = scmp.eq.s32.totalorder %s47, 0
      %s50 = sadd.s32 %s49, 1
      %s51 = scalar_select %p48, %s49, %s50
      %p54 = pneg %p48
      %p55 = scmp.eq.s32.totalorder %s18, 1
      %p56 = por %p54, %p55
      %p57 = scmp.ne.s32.totalorder %s49, %s52
      %p58 = scmp.eq.s32.totalorder %s18, 0
      %p59 = por %p57, %p58
      %p60 = scmp.ne.s32.totalorder %s49, %s52
      %p61 = scmp.eq.s32.totalorder %s23, 1
      %p62 = por %p60, %p61
      %p63 = scmp.ne.s32.totalorder %s52, %s53
      %p64 = scmp.eq.s32.totalorder %s23, 0
      %p65 = por %p63, %p64
      %p66 = scmp.ne.s32.totalorder %s52, %s53
      %p67 = scmp.eq.s32.totalorder %s24, 1
      %p68 = por %p66, %p67
      %p70 = scmp.ne.s32.totalorder %s53, %s69
      %p71 = scmp.eq.s32.totalorder %s24, 0
      %p72 = por %p70, %p71
      %s74 = sadd.s32 %s73, 1
      %p77 = scmp.eq.s32.totalorder %s18, 1
      %p78 = scmp.ne.s32.totalorder %s73, %s75
      %p79 = scmp.eq.s32.totalorder %s18, 0
      %p80 = por %p78, %p79
      %p81 = scmp.ne.s32.totalorder %s73, %s75
      %p82 = scmp.eq.s32.totalorder %s23, 1
      %p83 = por %p81, %p82
      %p84 = scmp.ne.s32.totalorder %s75, %s76
      %p85 = scmp.eq.s32.totalorder %s23, 0
      %p86 = por %p84, %p85
      %p87 = scmp.ne.s32.totalorder %s75, %s76
      %p88 = scmp.eq.s32.totalorder %s24, 1
      %p89 = por %p87, %p88
      %p91 = scmp.ne.s32.totalorder %s76, %s90
      %p92 = scmp.eq.s32.totalorder %s24, 0
      %p93 = por %p91, %p92
      %s95 = sadd.s32 %s94, 1
      %p98 = scmp.eq.s32.totalorder %s18, 1
      %p99 = scmp.ne.s32.totalorder %s94, %s96
      %p100 = scmp.eq.s32.totalorder %s18, 0
      %p101 = por %p99, %p100
      %p102 = scmp.ne.s32.totalorder %s94, %s96
      %p103 = scmp.eq.s32.totalorder %s23, 1
      %p104 = por %p102, %p103
      %p105 = scmp.ne.s32.totalorder %s96, %s97
      %p106 = scmp.eq.s32.totalorder %s23, 0
      %p107 = por %p105, %p106
      %p108 = scmp.ne.s32.totalorder %s96, %s97
      %p109 = scmp.eq.s32.totalorder %s24, 1
      %p110 = por %p108, %p109
      %p112 = scmp.ne.s32.totalorder %s97, %s111
      %p113 = scmp.eq.s32.totalorder %s24, 0
      %p114 = por %p112, %p113
      %s115 = ssub.s32 %s18, %s25
      %p116 = scmp.eq.s32.totalorder %s115, 0
      %s118 = sadd.s32 %s117, 1
      %s119 = scalar_select %p116, %s117, %s118
      %p122 = pneg %p116
      %p123 = scmp.eq.s32.totalorder %s18, 1
      %p124 = por %p122, %p123
      %p125 = scmp.ne.s32.totalorder %s117, %s120
      %p126 = scmp.eq.s32.totalorder %s18, 0
      %p127 = por %p125, %p126
      %p128 = scmp.ne.s32.totalorder %s117, %s120
      %p129 = scmp.eq.s32.totalorder %s23, 1
      %p130 = por %p128, %p129
      %p131 = scmp.ne.s32.totalorder %s120, %s121
      %p132 = scmp.eq.s32.totalorder %s23, 0
      %p133 = por %p131, %p132
      %p134 = scmp.ne.s32.totalorder %s120, %s121
      %p135 = scmp.eq.s32.totalorder %s24, 1
      %p136 = por %p134, %p135
      %p138 = scmp.ne.s32.totalorder %s121, %s137
      %p139 = scmp.eq.s32.totalorder %s24, 0
      %p140 = por %p138, %p139
      %p141 = scmp.le.s32.totalorder 1, %s18
      %p142 = scmp.lt.s32.totalorder %s18, 3
      %p143 = pnand %p141, %p142
      %p144 = pneg %p143
      // Predicated region
      $region9: #{tpu_custom_call.1} parent=5 // pred_check
        _
      $region10: #{tpu_custom_call.1} parent=5 // pred_check_branch
        %146 = sbr.rel (%p143) target = $region12
      $region11: #{tpu_custom_call.1} parent=5 // pred_region
        %s147 = ssub.s32 %s18, 1
        // Predicated region
        $region13: #{tpu_custom_call.1} parent=11 // pred_check
          %p148 = pneg %p39
        $region14: #{tpu_custom_call.1} parent=11 // pred_check_branch
          %150 = sbr.rel (%p148) target = $region16
        $region15: #{tpu_custom_call.1} parent=11 // pred_region
          _
        $region16: #{tpu_custom_call.1} parent=11 // pred_fallthru
          _
        // Predicated region
        $region17: #{tpu_custom_call.1} parent=11 // pred_check
          %p151 = pneg %p86
        $region18: #{tpu_custom_call.1} parent=11 // pred_check_branch
          %153 = sbr.rel (%p151) target = $region20
        $region19: #{tpu_custom_call.1} parent=11 // pred_region
          %s155 = ssub.s32 512, 512
          %156 = vsyncadd [#allocation7], %s155
          %s157 = sshll.u32 [#allocation6], 4
          %s158 = int_to_ptr.vmem [resolvable:$true] %s157
          %163 = dma.hbm_to_vmem [thread:$0]  %s2, 512, %s158, [#allocation7], 128, 128, 8
        $region20: #{tpu_custom_call.1} parent=11 // pred_fallthru
          _
        // Predicated region
        $region21: #{tpu_custom_call.1} parent=11 // pred_check
          %p164 = pneg %p107
        $region22: #{tpu_custom_call.1} parent=11 // pred_check_branch
          %166 = sbr.rel (%p164) target = $region24
        $region23: #{tpu_custom_call.1} parent=11 // pred_region
          %s168 = ssub.s32 512, 512
          %169 = vsyncadd [#allocation7], %s168
          %s170 = sshll.u32 [#allocation8], 4
          %s171 = int_to_ptr.vmem [resolvable:$true] %s170
          %176 = dma.hbm_to_vmem [thread:$0]  %s3, 512, %s171, [#allocation7], 128, 128, 8
        $region24: #{tpu_custom_call.1} parent=11 // pred_fallthru
          _
      $region12: #{tpu_custom_call.1} parent=5 // pred_fallthru
        _
      %p177 = scmp.lt.s32.totalorder %s18, 2
      // Predicated region
      $region25: #{tpu_custom_call.1} parent=5 // pred_check
        %p178 = pneg %p177
      $region26: #{tpu_custom_call.1} parent=5 // pred_check_branch
        %180 = sbr.rel (%p178) target = $region28
      $region27: #{tpu_custom_call.1} parent=5 // pred_region
        // Predicated region
        $region29: #{tpu_custom_call.1} parent=27 // pred_check
          %p181 = pneg %p59
        $region30: #{tpu_custom_call.1} parent=27 // pred_check_branch
          %183 = sbr.rel (%p181) target = $region32
        $region31: #{tpu_custom_call.1} parent=27 // pred_region
          %s184 = sand.u32 %s49, 1
          %s185 = scalar_lea.sflag [#allocation4], %s184
          %s186 = sand.u32 %s49, 1
          %s187 = smul.addr %s186, 64
          %s188 = scalar_lea.vmem [#allocation3], %s187
          %s190 = ssub.s32 1024, 1024
          %191 = vsyncadd %s185, %s190
          %s192 = smul.addr %s18, 8
          %s193 = smul.addr %s192, 128
          %s194 = scalar_lea.hbm %s1, %s193
          %s195 = sshll.u32 %s188, 4
          %s196 = int_to_ptr.vmem [resolvable:$true] %s195
          %201 = dma.hbm_to_vmem [thread:$0]  %s194, 1024, %s196, %s185, 256, 256, 16
        $region32: #{tpu_custom_call.1} parent=27 // pred_fallthru
          _
      $region28: #{tpu_custom_call.1} parent=5 // pred_fallthru
        _
      %p202 = scmp.le.s32.totalorder 1, %s18
      %p203 = scmp.lt.s32.totalorder %s18, 3
      %p204 = pnand %p202, %p203
      %p205 = pneg %p204
      // Predicated region
      $region33: #{tpu_custom_call.1} parent=5 // pred_check
        _
      $region34: #{tpu_custom_call.1} parent=5 // pred_check_branch
        %207 = sbr.rel (%p204) target = $region36
      $region35: #{tpu_custom_call.1} parent=5 // pred_region
        %s208 = ssub.s32 %s18, 1
        %s209 = sand.u32 %s52, 1
        %s210 = scalar_lea.sflag [#allocation4], %s209
        %s211 = sand.u32 %s52, 1
        %s212 = smul.addr %s211, 64
        %s213 = scalar_lea.vmem [#allocation3], %s212
        // Predicated region
        $region37: #{tpu_custom_call.1} parent=35 // pred_check
          %p214 = pneg %p65
        $region38: #{tpu_custom_call.1} parent=35 // pred_check_branch
          %216 = sbr.rel (%p214) target = $region40
        $region39: #{tpu_custom_call.1} parent=35 // pred_region
          %217 = dma.done %s210, 1024
        $region40: #{tpu_custom_call.1} parent=35 // pred_fallthru
          _
        // Predicated region
        $region41: #{tpu_custom_call.1} parent=35 // pred_check
          %p218 = pneg %p86
        $region42: #{tpu_custom_call.1} parent=35 // pred_check_branch
          %220 = sbr.rel (%p218) target = $region44
        $region43: #{tpu_custom_call.1} parent=35 // pred_region
          %221 = dma.done [#allocation7], 512
        $region44: #{tpu_custom_call.1} parent=35 // pred_fallthru
          _
        // Predicated region
        $region45: #{tpu_custom_call.1} parent=35 // pred_check
          %p222 = pneg %p107
        $region46: #{tpu_custom_call.1} parent=35 // pred_check_branch
          %224 = sbr.rel (%p222) target = $region48
        $region47: #{tpu_custom_call.1} parent=35 // pred_region
          %225 = dma.done [#allocation7], 512
        $region48: #{tpu_custom_call.1} parent=35 // pred_fallthru
          _
        %p226 = pneg %p39
        %p227 = pneg %p36
        %s228 = sand.u32 %s52, 1
        %s229 = scalar_lea.sflag [#allocation4], %s228
        %s230 = sand.u32 %s52, 1
        %s231 = smul.addr %s230, 64
        %s232 = scalar_lea.vmem [#allocation3], %s231
        %p233 = pneg %p65
        %p234 = pneg %p62
        %p235 = pneg %p86
        %p236 = pneg %p83
        %p237 = pneg %p107
        %p238 = pneg %p104
        %p239 = pneg %p133
        %p240 = pneg %p130
        %s241 = sand.u32 %s120, 1
        %s242 = scalar_lea.sflag [#allocation5], %s241
        %s243 = sand.u32 %s120, 1
        %s244 = smul.addr %s243, 64
        %s245 = scalar_lea.vmem [#allocation9], %s244
        %v246 = vld [vmem:[%s213] sm:$0xff]
        %v247 = vld [vmem:[%s213 + $0x8] sm:$0xff]
        %v248 = vld [vmem:[%s213 + $0x10] sm:$0xff]
        %v249 = vld [vmem:[%s213 + $0x18] sm:$0xff]
        %v250 = vld [vmem:[%s213 + $0x20] sm:$0xff]
        %v251 = vld [vmem:[%s213 + $0x28] sm:$0xff]
        %v252 = vld [vmem:[%s213 + $0x30] sm:$0xff]
        %v253 = vld [vmem:[%s213 + $0x38] sm:$0xff]
        %v254 = vld [vmem:[#allocation6] sm:$0xff]
        %v255 = vld [vmem:[#allocation6 + $0x8] sm:$0xff]
        %v256 = vld [vmem:[#allocation6 + $0x10] sm:$0xff]
        %v257 = vld [vmem:[#allocation6 + $0x18] sm:$0xff]
        %v258 = vld [vmem:[#allocation8] sm:$0xff]
        %v259 = vld [vmem:[#allocation8 + $0x8] sm:$0xff]
        %v260 = vld [vmem:[#allocation8 + $0x10] sm:$0xff]
        %v261 = vld [vmem:[#allocation8 + $0x18] sm:$0xff]
        %vm262 = vcmask 261120
        %v264 = vsel %vm262, %v254, 0
        %v267 = vsel %vm262, %v255, 0
        %v270 = vsel %vm262, %v256, 0
        %v273 = vsel %vm262, %v257, 0
        %275 = vmatprep.subr.mxu0 %v247
        %276 = vmatpush1.msra.mxu0 %v246
        %277 = vmatprep.subr.mxu0 %v249
        %278 = vmatpush1.msra.mxu0 %v248
        %279 = vmatprep.subr.mxu0 %v251
        %280 = vmatpush1.msra.mxu0 %v250
        %281 = vmatprep.subr.mxu0 %v253
        %282 = vmatpush1.msra.mxu0 %v252
        %283 = vmatprep.subr.mxu0 0.0
        %284 = vmatpush1.msra.mxu0 0.0
        %285 = vmatprep.subr.mxu0 0.0
        %286 = vmatpush1.msra.mxu0 0.0
        %287 = vmatprep.subr.mxu0 0.0
        %288 = vmatpush1.msra.mxu0 0.0
        %289 = vmatprep.subr.mxu0 0.0
        %290 = vmatpush1.msra.mxu0 0.0
        %291 = vmatprep.subr.mxu0 0.0
        %292 = vmatpush1.msra.mxu0 0.0
        %293 = vmatprep.subr.mxu0 0.0
        %294 = vmatpush1.msra.mxu0 0.0
        %295 = vmatprep.subr.mxu0 0.0
        %296 = vmatpush1.msra.mxu0 0.0
        %297 = vmatprep.subr.mxu0 0.0
        %298 = vmatpush1.msra.mxu0 0.0
        %299 = vmatprep.subr.mxu0 0.0
        %300 = vmatpush1.msra.mxu0 0.0
        %301 = vmatprep.subr.mxu0 0.0
        %302 = vmatpush1.msra.mxu0 0.0
        %303 = vmatprep.subr.mxu0 0.0
        %304 = vmatpush1.msra.mxu0 0.0
        %305 = vmatprep.subr.mxu0 0.0
        %306 = vmatpush1.msra.mxu0 0.0
        %307 = vmatprep.subr.mxu0 0.0
        %308 = vmatpush1.msra.mxu0 0.0
        %309 = vmatprep.subr.mxu0 0.0
        %310 = vmatpush1.msra.mxu0 0.0
        %311 = vmatprep.subr.mxu0 0.0
        %312 = vmatpush1.msra.mxu0 0.0
        %313 = vmatprep.subr.mxu0 0.0
        %314 = vmatpush1.msra.mxu0 0.0
        %315 = vmatprep.subr.mxu0 0.0
        %316 = vmatpush1.msra.mxu0 0.0
        %317 = vmatprep.subr.mxu0 0.0
        %318 = vmatpush1.msra.mxu0 0.0
        %319 = vmatprep.subr.mxu0 0.0
        %320 = vmatpush1.msra.mxu0 0.0
        %321 = vmatprep.subr.mxu0 0.0
        %322 = vmatpush1.msra.mxu0 0.0
        %323 = vmatprep.subr.mxu0 0.0
        %324 = vmatpush1.msra.mxu0 0.0
        %325 = vmatprep.subr.mxu0 0.0
        %326 = vmatpush1.msra.mxu0 0.0
        %327 = vmatprep.subr.mxu0 0.0
        %328 = vmatpush1.msra.mxu0 0.0
        %329 = vmatprep.subr.mxu0 0.0
        %330 = vmatpush1.msra.mxu0 0.0
        %331 = vmatprep.subr.mxu0 0.0
        %332 = vmatpush1.msra.mxu0 0.0
        %333 = vmatprep.subr.mxu0 0.0
        %334 = vmatpush1.msra.mxu0 0.0
        %335 = vmatprep.subr.mxu0 0.0
        %336 = vmatpush1.msra.mxu0 0.0
        %337 = vmatprep.subr.mxu0 0.0
        %338 = vmatpush1.msra.mxu0 0.0
        %339 = vmatprep.mubr.f32.mxu0 0.0
        %340 = vmatmul.mubr.f32.gmra.mrb[0].mxu0 %v264
        %v341 = vpop.f32.mrb[0].mxu0
        %v342 = vadd.f32 0.0, %v341
        %v343 = vpop.f32.mrb[0].mxu0
        %v344 = vadd.f32 0.0, %v343
        %345 = vmatprep.mubr.f32.mxu0 0.0
        %346 = vmatmul.mubr.f32.gmra.mrb[0].mxu0 %v267
        %v347 = vpop.f32.mrb[0].mxu0
        %v348 = vadd.f32 0.0, %v347
        %v349 = vpop.f32.mrb[0].mxu0
        %v350 = vadd.f32 0.0, %v349
        %351 = vmatprep.mubr.f32.mxu0 0.0
        %352 = vmatmul.mubr.f32.gmra.mrb[0].mxu0 %v270
        %v353 = vpop.f32.mrb[0].mxu0
        %v354 = vadd.f32 0.0, %v353
        %v355 = vpop.f32.mrb[0].mxu0
        %v356 = vadd.f32 0.0, %v355
        %357 = vmatprep.mubr.f32.mxu0 0.0
        %358 = vmatmul.mubr.f32.gmra.mrb[0].mxu0 %v273
        %v359 = vpop.f32.mrb[0].mxu0
        %v360 = vadd.f32 0.0, %v359
        %v361 = vpop.f32.mrb[0].mxu0
        %v362 = vadd.f32 0.0, %v361
        %363 = vdwg.mxu0
        %v364 = vld [vmem:[%s213] sm:$0xff]
        %v365 = vld [vmem:[%s213 + $0x10] sm:$0xff]
        %v366 = vld [vmem:[%s213 + $0x20] sm:$0xff]
        %v367 = vld [vmem:[%s213 + $0x30] sm:$0xff]
        %368 = vxpose.xlu0.b32.start [1/16] %v364, 128
        %369 = vxpose.xlu0.b32.cont [2/16] %v365, 128
        %370 = vxpose.xlu0.b32.cont [3/16] %v366, 128
        %371 = vxpose.xlu0.b32.cont [4/16] %v367, 128
        %372 = vxpose.xlu0.b32.cont [5/16] 0.0, 128
        %373 = vxpose.xlu0.b32.cont [6/16] 0.0, 128
        %374 = vxpose.xlu0.b32.cont [7/16] 0.0, 128
        %375 = vxpose.xlu0.b32.cont [8/16] 0.0, 128
        %376 = vxpose.xlu0.b32.cont [9/16] 0.0, 128
        %377 = vxpose.xlu0.b32.cont [10/16] 0.0, 128
        %378 = vxpose.xlu0.b32.cont [11/16] 0.0, 128
        %379 = vxpose.xlu0.b32.cont [12/16] 0.0, 128
        %380 = vxpose.xlu0.b32.cont [13/16] 0.0, 128
        %381 = vxpose.xlu0.b32.cont [14/16] 0.0, 128
        %382 = vxpose.xlu0.b32.cont [15/16] 0.0, 128
        %383 = vxpose.xlu0.b32.end [16/16] 0.0, 128
        %v384 = vpop.trf.xlu0
        %v385 = vpop.trf.xlu0
        %v386 = vpop.trf.xlu0
        %v387 = vpop.trf.xlu0
        %v388 = vpop.trf.xlu0
        %v389 = vpop.trf.xlu0
        %v390 = vpop.trf.xlu0
        %v391 = vpop.trf.xlu0
        %v392 = vpop.trf.xlu0
        %v393 = vpop.trf.xlu0
        %v394 = vpop.trf.xlu0
        %v395 = vpop.trf.xlu0
        %v396 = vpop.trf.xlu0
        %v397 = vpop.trf.xlu0
        %v398 = vpop.trf.xlu0
        %v399 = vpop.trf.xlu0
        %v401 = vsel %vm262, %v384, 0
        %v404 = vsel %vm262, %v385, 0
        %v407 = vsel %vm262, %v386, 0
        %v410 = vsel %vm262, %v387, 0
        %v413 = vsel %vm262, %v388, 0
        %v416 = vsel %vm262, %v389, 0
        %v419 = vsel %vm262, %v390, 0
        %v422 = vsel %vm262, %v391, 0
        %v425 = vsel %vm262, %v392, 0
        %v428 = vsel %vm262, %v393, 0
        %v431 = vsel %vm262, %v394, 0
        %v434 = vsel %vm262, %v395, 0
        %v437 = vsel %vm262, %v396, 0
        %v440 = vsel %vm262, %v397, 0
        %v443 = vsel %vm262, %v398, 0
        %v446 = vsel %vm262, %v399, 0
        %448 = vmatprep.subr.mxu0 %v344
        %449 = vmatpush1.msra.mxu0 %v342
        %450 = vmatprep.subr.mxu0 %v350
        %451 = vmatpush1.msra.mxu0 %v348
        %452 = vmatprep.subr.mxu0 %v356
        %453 = vmatpush1.msra.mxu0 %v354
        %454 = vmatprep.subr.mxu0 %v362
        %455 = vmatpush1.msra.mxu0 %v360
        %456 = vmatprep.subr.mxu0 0.0
        %457 = vmatpush1.msra.mxu0 0.0
        %458 = vmatprep.subr.mxu0 0.0
        %459 = vmatpush1.msra.mxu0 0.0
        %460 = vmatprep.subr.mxu0 0.0
        %461 = vmatpush1.msra.mxu0 0.0
        %462 = vmatprep.subr.mxu0 0.0
        %463 = vmatpush1.msra.mxu0 0.0
        %464 = vmatprep.subr.mxu0 0.0
        %465 = vmatpush1.msra.mxu0 0.0
        %466 = vmatprep.subr.mxu0 0.0
        %467 = vmatpush1.msra.mxu0 0.0
        %468 = vmatprep.subr.mxu0 0.0
        %469 = vmatpush1.msra.mxu0 0.0
        %470 = vmatprep.subr.mxu0 0.0
        %471 = vmatpush1.msra.mxu0 0.0
        %472 = vmatprep.subr.mxu0 0.0
        %473 = vmatpush1.msra.mxu0 0.0
        %474 = vmatprep.subr.mxu0 0.0
        %475 = vmatpush1.msra.mxu0 0.0
        %476 = vmatprep.subr.mxu0 0.0
        %477 = vmatpush1.msra.mxu0 0.0
        %478 = vmatprep.subr.mxu0 0.0
        %479 = vmatpush1.msra.mxu0 0.0
        %480 = vmatprep.subr.mxu0 0.0
        %481 = vmatpush1.msra.mxu0 0.0
        %482 = vmatprep.subr.mxu0 0.0
        %483 = vmatpush1.msra.mxu0 0.0
        %484 = vmatprep.subr.mxu0 0.0
        %485 = vmatpush1.msra.mxu0 0.0
        %486 = vmatprep.subr.mxu0 0.0
        %487 = vmatpush1.msra.mxu0 0.0
        %488 = vmatprep.subr.mxu0 0.0
        %489 = vmatpush1.msra.mxu0 0.0
        %490 = vmatprep.subr.mxu0 0.0
        %491 = vmatpush1.msra.mxu0 0.0
        %492 = vmatprep.subr.mxu0 0.0
        %493 = vmatpush1.msra.mxu0 0.0
        %494 = vmatprep.subr.mxu0 0.0
        %495 = vmatpush1.msra.mxu0 0.0
        %496 = vmatprep.subr.mxu0 0.0
        %497 = vmatpush1.msra.mxu0 0.0
        %498 = vmatprep.subr.mxu0 0.0
        %499 = vmatpush1.msra.mxu0 0.0
        %500 = vmatprep.subr.mxu0 0.0
        %501 = vmatpush1.msra.mxu0 0.0
        %502 = vmatprep.subr.mxu0 0.0
        %503 = vmatpush1.msra.mxu0 0.0
        %504 = vmatprep.subr.mxu0 0.0
        %505 = vmatpush1.msra.mxu0 0.0
        %506 = vmatprep.subr.mxu0 0.0
        %507 = vmatpush1.msra.mxu0 0.0
        %508 = vmatprep.subr.mxu0 0.0
        %509 = vmatpush1.msra.mxu0 0.0
        %510 = vmatprep.subr.mxu0 0.0
        %511 = vmatpush1.msra.mxu0 0.0
        %512 = vmatprep.mubr.f32.mxu0 0.0
        %513 = vmatmul.mubr.f32.gmra.mrb[0].mxu0 %v401
        %v514 = vpop.f32.mrb[0].mxu0
        %v515 = vadd.f32 0.0, %v514
        %v516 = vpop.f32.mrb[0].mxu0
        %v517 = vadd.f32 0.0, %v516
        %518 = vmatprep.mubr.f32.mxu0 0.0
        %519 = vmatmul.mubr.f32.gmra.mrb[0].mxu0 %v404
        %v520 = vpop.f32.mrb[0].mxu0
        %v521 = vadd.f32 0.0, %v520
        %v522 = vpop.f32.mrb[0].mxu0
        %v523 = vadd.f32 0.0, %v522
        %524 = vmatprep.mubr.f32.mxu0 0.0
        %525 = vmatmul.mubr.f32.gmra.mrb[0].mxu0 %v407
        %v526 = vpop.f32.mrb[0].mxu0
        %v527 = vadd.f32 0.0, %v526
        %v528 = vpop.f32.mrb[0].mxu0
        %v529 = vadd.f32 0.0, %v528
        %530 = vmatprep.mubr.f32.mxu0 0.0
        %531 = vmatmul.mubr.f32.gmra.mrb[0].mxu0 %v410
        %v532 = vpop.f32.mrb[0].mxu0
        %v533 = vadd.f32 0.0, %v532
        %v534 = vpop.f32.mrb[0].mxu0
        %v535 = vadd.f32 0.0, %v534
        %536 = vmatprep.mubr.f32.mxu0 0.0
        %537 = vmatmul.mubr.f32.gmra.mrb[0].mxu0 %v413
        %v538 = vpop.f32.mrb[0].mxu0
        %v539 = vadd.f32 0.0, %v538
        %v540 = vpop.f32.mrb[0].mxu0
        %v541 = vadd.f32 0.0, %v540
        %542 = vmatprep.mubr.f32.mxu0 0.0
        %543 = vmatmul.mubr.f32.gmra.mrb[0].mxu0 %v416
        %v544 = vpop.f32.mrb[0].mxu0
        %v545 = vadd.f32 0.0, %v544
        %v546 = vpop.f32.mrb[0].mxu0
        %v547 = vadd.f32 0.0, %v546
        %548 = vmatprep.mubr.f32.mxu0 0.0
        %549 = vmatmul.mubr.f32.gmra.mrb[0].mxu0 %v419
        %v550 = vpop.f32.mrb[0].mxu0
        %v551 = vadd.f32 0.0, %v550
        %v552 = vpop.f32.mrb[0].mxu0
        %v553 = vadd.f32 0.0, %v552
        %554 = vmatprep.mubr.f32.mxu0 0.0
        %555 = vmatmul.mubr.f32.gmra.mrb[0].mxu0 %v422
        %v556 = vpop.f32.mrb[0].mxu0
        %v557 = vadd.f32 0.0, %v556
        %v558 = vpop.f32.mrb[0].mxu0
        %v559 = vadd.f32 0.0, %v558
        %560 = vmatprep.mubr.f32.mxu0 0.0
        %561 = vmatmul.mubr.f32.gmra.mrb[0].mxu0 %v425
        %v562 = vpop.f32.mrb[0].mxu0
        %v563 = vadd.f32 0.0, %v562
        %v564 = vpop.f32.mrb[0].mxu0
        %v565 = vadd.f32 0.0, %v564
        %566 = vmatprep.mubr.f32.mxu0 0.0
        %567 = vmatmul.mubr.f32.gmra.mrb[0].mxu0 %v428
        %v568 = vpop.f32.mrb[0].mxu0
        %v569 = vadd.f32 0.0, %v568
        %v570 = vpop.f32.mrb[0].mxu0
        %v571 = vadd.f32 0.0, %v570
        %572 = vmatprep.mubr.f32.mxu0 0.0
        %573 = vmatmul.mubr.f32.gmra.mrb[0].mxu0 %v431
        %v574 = vpop.f32.mrb[0].mxu0
        %v575 = vadd.f32 0.0, %v574
        %v576 = vpop.f32.mrb[0].mxu0
        %v577 = vadd.f32 0.0, %v576
        %578 = vmatprep.mubr.f32.mxu0 0.0
        %579 = vmatmul.mubr.f32.gmra.mrb[0].mxu0 %v434
        %v580 = vpop.f32.mrb[0].mxu0
        %v581 = vadd.f32 0.0, %v580
        %v582 = vpop.f32.mrb[0].mxu0
        %v583 = vadd.f32 0.0, %v582
        %584 = vmatprep.mubr.f32.mxu0 0.0
        %585 = vmatmul.mubr.f32.gmra.mrb[0].mxu0 %v437
        %v586 = vpop.f32.mrb[0].mxu0
        %v587 = vadd.f32 0.0, %v586
        %v588 = vpop.f32.mrb[0].mxu0
        %v589 = vadd.f32 0.0, %v588
        %590 = vmatprep.mubr.f32.mxu0 0.0
        %591 = vmatmul.mubr.f32.gmra.mrb[0].mxu0 %v440
        %v592 = vpop.f32.mrb[0].mxu0
        %v593 = vadd.f32 0.0, %v592
        %v594 = vpop.f32.mrb[0].mxu0
        %v595 = vadd.f32 0.0, %v594
        %596 = vmatprep.mubr.f32.mxu0 0.0
        %597 = vmatmul.mubr.f32.gmra.mrb[0].mxu0 %v443
        %v598 = vpop.f32.mrb[0].mxu0
        %v599 = vadd.f32 0.0, %v598
        %v600 = vpop.f32.mrb[0].mxu0
        %v601 = vadd.f32 0.0, %v600
        %602 = vmatprep.mubr.f32.mxu0 0.0
        %603 = vmatmul.mubr.f32.gmra.mrb[0].mxu0 %v446
        %v604 = vpop.f32.mrb[0].mxu0
        %v605 = vadd.f32 0.0, %v604
        %v606 = vpop.f32.mrb[0].mxu0
        %v607 = vadd.f32 0.0, %v606
        %608 = vdwg.mxu0
        %v609 = vmax.f32 %v515, %v517
        %610 = vmax.xlane.f32.xlu0 %v609
        %v611 = vpop.xlane.xlu0 %610
        %v612 = vmax.f32 %v521, %v523
        %613 = vmax.xlane.f32.xlu0 %v612
        %v614 = vpop.xlane.xlu0 %613
        %v615 = vmax.f32 %v527, %v529
        %616 = vmax.xlane.f32.xlu0 %v615
        %v617 = vpop.xlane.xlu0 %616
        %v618 = vmax.f32 %v533, %v535
        %619 = vmax.xlane.f32.xlu0 %v618
        %v620 = vpop.xlane.xlu0 %619
        %v621 = vmax.f32 %v539, %v541
        %622 = vmax.xlane.f32.xlu0 %v621
        %v623 = vpop.xlane.xlu0 %622
        %v624 = vmax.f32 %v545, %v547
        %625 = vmax.xlane.f32.xlu0 %v624
        %v626 = vpop.xlane.xlu0 %625
        %v627 = vmax.f32 %v551, %v553
        %628 = vmax.xlane.f32.xlu0 %v627
        %v629 = vpop.xlane.xlu0 %628
        %v630 = vmax.f32 %v557, %v559
        %631 = vmax.xlane.f32.xlu0 %v630
        %v632 = vpop.xlane.xlu0 %631
        %v633 = vmax.f32 %v563, %v565
        %634 = vmax.xlane.f32.xlu0 %v633
        %v635 = vpop.xlane.xlu0 %634
        %v636 = vmax.f32 %v569, %v571
        %637 = vmax.xlane.f32.xlu0 %v636
        %v638 = vpop.xlane.xlu0 %637
        %v639 = vmax.f32 %v575, %v577
        %640 = vmax.xlane.f32.xlu0 %v639
        %v641 = vpop.xlane.xlu0 %640
        %v642 = vmax.f32 %v581, %v583
        %643 = vmax.xlane.f32.xlu0 %v642
        %v644 = vpop.xlane.xlu0 %643
        %v645 = vmax.f32 %v587, %v589
        %646 = vmax.xlane.f32.xlu0 %v645
        %v647 = vpop.xlane.xlu0 %646
        %v648 = vmax.f32 %v593, %v595
        %649 = vmax.xlane.f32.xlu0 %v648
        %v650 = vpop.xlane.xlu0 %649
        %v651 = vmax.f32 %v599, %v601
        %652 = vmax.xlane.f32.xlu0 %v651
        %v653 = vpop.xlane.xlu0 %652
        %v654 = vmax.f32 %v605, %v607
        %655 = vmax.xlane.f32.xlu0 %v654
        %v656 = vpop.xlane.xlu0 %655
        %v657 = vsub.f32 %v515, %v611
        %v658 = vsub.f32 %v517, %v611
        %v659 = vsub.f32 %v521, %v614
        %v660 = vsub.f32 %v523, %v614
        %v661 = vsub.f32 %v527, %v617
        %v662 = vsub.f32 %v529, %v617
        %v663 = vsub.f32 %v533, %v620
        %v664 = vsub.f32 %v535, %v620
        %v665 = vsub.f32 %v539, %v623
        %v666 = vsub.f32 %v541, %v623
        %v667 = vsub.f32 %v545, %v626
        %v668 = vsub.f32 %v547, %v626
        %v669 = vsub.f32 %v551, %v629
        %v670 = vsub.f32 %v553, %v629
        %v671 = vsub.f32 %v557, %v632
        %v672 = vsub.f32 %v559, %v632
        %v673 = vsub.f32 %v563, %v635
        %v674 = vsub.f32 %v565, %v635
        %v675 = vsub.f32 %v569, %v638
        %v676 = vsub.f32 %v571, %v638
        %v677 = vsub.f32 %v575, %v641
        %v678 = vsub.f32 %v577, %v641
        %v679 = vsub.f32 %v581, %v644
        %v680 = vsub.f32 %v583, %v644
        %v681 = vsub.f32 %v587, %v647
        %v682 = vsub.f32 %v589, %v647
        %v683 = vsub.f32 %v593, %v650
        %v684 = vsub.f32 %v595, %v650
        %v685 = vsub.f32 %v599, %v653
        %v686 = vsub.f32 %v601, %v653
        %v687 = vsub.f32 %v605, %v656
        %v688 = vsub.f32 %v607, %v656
        %v689 = vmul.f32 %v657, 1.442695
        %v690 = vpow.pop %v689
        %v691 = vmul.f32 %v658, 1.442695
        %v692 = vpow.pop %v691
        %v693 = vmul.f32 %v659, 1.442695
        %v694 = vpow.pop %v693
        %v695 = vmul.f32 %v660, 1.442695
        %v696 = vpow.pop %v695
        %v697 = vmul.f32 %v661, 1.442695
        %v698 = vpow.pop %v697
        %v699 = vmul.f32 %v662, 1.442695
        %v700 = vpow.pop %v699
        %v701 = vmul.f32 %v663, 1.442695
        %v702 = vpow.pop %v701
        %v703 = vmul.f32 %v664, 1.442695
        %v704 = vpow.pop %v703
        %v705 = vmul.f32 %v665, 1.442695
        %v706 = vpow.pop %v705
        %v707 = vmul.f32 %v666, 1.442695
        %v708 = vpow.pop %v707
        %v709 = vmul.f32 %v667, 1.442695
        %v710 = vpow.pop %v709
        %v711 = vmul.f32 %v668, 1.442695
        %v712 = vpow.pop %v711
        %v713 = vmul.f32 %v669, 1.442695
        %v714 = vpow.pop %v713
        %v715 = vmul.f32 %v670, 1.442695
        %v716 = vpow.pop %v715
        %v717 = vmul.f32 %v671, 1.442695
        %v718 = vpow.pop %v717
        %v719 = vmul.f32 %v672, 1.442695
        %v720 = vpow.pop %v719
        %v721 = vmul.f32 %v673, 1.442695
        %v722 = vpow.pop %v721
        %v723 = vmul.f32 %v674, 1.442695
        %v724 = vpow.pop %v723
        %v725 = vmul.f32 %v675, 1.442695
        %v726 = vpow.pop %v725
        %v727 = vmul.f32 %v676, 1.442695
        %v728 = vpow.pop %v727
        %v729 = vmul.f32 %v677, 1.442695
        %v730 = vpow.pop %v729
        %v731 = vmul.f32 %v678, 1.442695
        %v732 = vpow.pop %v731
        %v733 = vmul.f32 %v679, 1.442695
        %v734 = vpow.pop %v733
        %v735 = vmul.f32 %v680, 1.442695
        %v736 = vpow.pop %v735
        %v737 = vmul.f32 %v681, 1.442695
        %v738 = vpow.pop %v737
        %v739 = vmul.f32 %v682, 1.442695
        %v740 = vpow.pop %v739
        %v741 = vmul.f32 %v683, 1.442695
        %v742 = vpow.pop %v741
        %v743 = vmul.f32 %v684, 1.442695
        %v744 = vpow.pop %v743
        %v745 = vmul.f32 %v685, 1.442695
        %v746 = vpow.pop %v745
        %v747 = vmul.f32 %v686, 1.442695
        %v748 = vpow.pop %v747
        %v749 = vmul.f32 %v687, 1.442695
        %v750 = vpow.pop %v749
        %v751 = vmul.f32 %v688, 1.442695
        %v752 = vpow.pop %v751
        %v753 = vadd.f32 %v690, %v692
        %754 = vadd.xlane.f32.xlu0 %v753
        %v755 = vpop.xlane.xlu0 %754
        %v756 = vadd.f32 %v694, %v696
        %757 = vadd.xlane.f32.xlu0 %v756
        %v758 = vpop.xlane.xlu0 %757
        %v759 = vadd.f32 %v698, %v700
        %760 = vadd.xlane.f32.xlu0 %v759
        %v761 = vpop.xlane.xlu0 %760
        %v762 = vadd.f32 %v702, %v704
        %763 = vadd.xlane.f32.xlu0 %v762
        %v764 = vpop.xlane.xlu0 %763
        %v765 = vadd.f32 %v706, %v708
        %766 = vadd.xlane.f32.xlu0 %v765
        %v767 = vpop.xlane.xlu0 %766
        %v768 = vadd.f32 %v710, %v712
        %769 = vadd.xlane.f32.xlu0 %v768
        %v770 = vpop.xlane.xlu0 %769
        %v771 = vadd.f32 %v714, %v716
        %772 = vadd.xlane.f32.xlu0 %v771
        %v773 = vpop.xlane.xlu0 %772
        %v774 = vadd.f32 %v718, %v720
        %775 = vadd.xlane.f32.xlu0 %v774
        %v776 = vpop.xlane.xlu0 %775
        %v777 = vadd.f32 %v722, %v724
        %778 = vadd.xlane.f32.xlu0 %v777
        %v779 = vpop.xlane.xlu0 %778
        %v780 = vadd.f32 %v726, %v728
        %781 = vadd.xlane.f32.xlu0 %v780
        %v782 = vpop.xlane.xlu0 %781
        %v783 = vadd.f32 %v730, %v732
        %784 = vadd.xlane.f32.xlu0 %v783
        %v785 = vpop.xlane.xlu0 %784
        %v786 = vadd.f32 %v734, %v736
        %787 = vadd.xlane.f32.xlu0 %v786
        %v788 = vpop.xlane.xlu0 %787
        %v789 = vadd.f32 %v738, %v740
        %790 = vadd.xlane.f32.xlu0 %v789
        %v791 = vpop.xlane.xlu0 %790
        %v792 = vadd.f32 %v742, %v744
        %793 = vadd.xlane.f32.xlu0 %v792
        %v794 = vpop.xlane.xlu0 %793
        %v795 = vadd.f32 %v746, %v748
        %796 = vadd.xlane.f32.xlu0 %v795
        %v797 = vpop.xlane.xlu0 %796
        %v798 = vadd.f32 %v750, %v752
        %799 = vadd.xlane.f32.xlu0 %v798
        %v800 = vpop.xlane.xlu0 %799
        %v801 = vrcp.pop %v755
        %v802 = vrcp.pop %v758
        %v803 = vrcp.pop %v761
        %v804 = vrcp.pop %v764
        %v805 = vrcp.pop %v767
        %v806 = vrcp.pop %v770
        %v807 = vrcp.pop %v773
        %v808 = vrcp.pop %v776
        %v809 = vrcp.pop %v779
        %v810 = vrcp.pop %v782
        %v811 = vrcp.pop %v785
        %v812 = vrcp.pop %v788
        %v813 = vrcp.pop %v791
        %v814 = vrcp.pop %v794
        %v815 = vrcp.pop %v797
        %v816 = vrcp.pop %v800
        %v817 = vmul.f32 %v690, %v801
        %v818 = vmul.f32 %v692, %v801
        %v819 = vmul.f32 %v694, %v802
        %v820 = vmul.f32 %v696, %v802
        %v821 = vmul.f32 %v698, %v803
        %v822 = vmul.f32 %v700, %v803
        %v823 = vmul.f32 %v702, %v804
        %v824 = vmul.f32 %v704, %v804
        %v825 = vmul.f32 %v706, %v805
        %v826 = vmul.f32 %v708, %v805
        %v827 = vmul.f32 %v710, %v806
        %v828 = vmul.f32 %v712, %v806
        %v829 = vmul.f32 %v714, %v807
        %v830 = vmul.f32 %v716, %v807
        %v831 = vmul.f32 %v718, %v808
        %v832 = vmul.f32 %v720, %v808
        %v833 = vmul.f32 %v722, %v809
        %v834 = vmul.f32 %v724, %v809
        %v835 = vmul.f32 %v726, %v810
        %v836 = vmul.f32 %v728, %v810
        %v837 = vmul.f32 %v730, %v811
        %v838 = vmul.f32 %v732, %v811
        %v839 = vmul.f32 %v734, %v812
        %v840 = vmul.f32 %v736, %v812
        %v841 = vmul.f32 %v738, %v813
        %v842 = vmul.f32 %v740, %v813
        %v843 = vmul.f32 %v742, %v814
        %v844 = vmul.f32 %v744, %v814
        %v845 = vmul.f32 %v746, %v815
        %v846 = vmul.f32 %v748, %v815
        %v847 = vmul.f32 %v750, %v816
        %v848 = vmul.f32 %v752, %v816
        %s849 = scalar_lea.vmem %s213, 8 [#allocation3]
        %v850 = vld [vmem:[%s849] sm:$0xff]
        %v851 = vld [vmem:[%s849 + $0x10] sm:$0xff]
        %v852 = vld [vmem:[%s849 + $0x20] sm:$0xff]
        %v853 = vld [vmem:[%s849 + $0x30] sm:$0xff]
        %854 = vxpose.xlu0.b32.start [1/16] %v850, 128
        %855 = vxpose.xlu0.b32.cont [2/16] %v851, 128
        %856 = vxpose.xlu0.b32.cont [3/16] %v852, 128
        %857 = vxpose.xlu0.b32.cont [4/16] %v853, 128
        %858 = vxpose.xlu0.b32.cont [5/16] 0.0, 128
        %859 = vxpose.xlu0.b32.cont [6/16] 0.0, 128
        %860 = vxpose.xlu0.b32.cont [7/16] 0.0, 128
        %861 = vxpose.xlu0.b32.cont [8/16] 0.0, 128
        %862 = vxpose.xlu0.b32.cont [9/16] 0.0, 128
        %863 = vxpose.xlu0.b32.cont [10/16] 0.0, 128
        %864 = vxpose.xlu0.b32.cont [11/16] 0.0, 128
        %865 = vxpose.xlu0.b32.cont [12/16] 0.0, 128
        %866 = vxpose.xlu0.b32.cont [13/16] 0.0, 128
        %867 = vxpose.xlu0.b32.cont [14/16] 0.0, 128
        %868 = vxpose.xlu0.b32.cont [15/16] 0.0, 128
        %869 = vxpose.xlu0.b32.end [16/16] 0.0, 128
        %v870 = vpop.trf.xlu0
        %v871 = vpop.trf.xlu0
        %v872 = vpop.trf.xlu0
        %v873 = vpop.trf.xlu0
        %v874 = vpop.trf.xlu0
        %v875 = vpop.trf.xlu0
        %v876 = vpop.trf.xlu0
        %v877 = vpop.trf.xlu0
        %v878 = vpop.trf.xlu0
        %v879 = vpop.trf.xlu0
        %v880 = vpop.trf.xlu0
        %v881 = vpop.trf.xlu0
        %v882 = vpop.trf.xlu0
        %v883 = vpop.trf.xlu0
        %v884 = vpop.trf.xlu0
        %v885 = vpop.trf.xlu0
        %v887 = vsel %vm262, %v870, 0
        %v890 = vsel %vm262, %v871, 0
        %v893 = vsel %vm262, %v872, 0
        %v896 = vsel %vm262, %v873, 0
        %v899 = vsel %vm262, %v874, 0
        %v902 = vsel %vm262, %v875, 0
        %v905 = vsel %vm262, %v876, 0
        %v908 = vsel %vm262, %v877, 0
        %v911 = vsel %vm262, %v878, 0
        %v914 = vsel %vm262, %v879, 0
        %v917 = vsel %vm262, %v880, 0
        %v920 = vsel %vm262, %v881, 0
        %v923 = vsel %vm262, %v882, 0
        %v926 = vsel %vm262, %v883, 0
        %v929 = vsel %vm262, %v884, 0
        %v932 = vsel %vm262, %v885, 0
        %934 = vmatprep.subr.mxu0 %v344
        %935 = vmatpush1.msra.mxu0 %v342
        %936 = vmatprep.subr.mxu0 %v350
        %937 = vmatpush1.msra.mxu0 %v348
        %938 = vmatprep.subr.mxu0 %v356
        %939 = vmatpush1.msra.mxu0 %v354
        %940 = vmatprep.subr.mxu0 %v362
        %941 = vmatpush1.msra.mxu0 %v360
        %942 = vmatprep.subr.mxu0 0.0
        %943 = vmatpush1.msra.mxu0 0.0
        %944 = vmatprep.subr.mxu0 0.0
        %945 = vmatpush1.msra.mxu0 0.0
        %946 = vmatprep.subr.mxu0 0.0
        %947 = vmatpush1.msra.mxu0 0.0
        %948 = vmatprep.subr.mxu0 0.0
        %949 = vmatpush1.msra.mxu0 0.0
        %950 = vmatprep.subr.mxu0 0.0
        %951 = vmatpush1.msra.mxu0 0.0
        %952 = vmatprep.subr.mxu0 0.0
        %953 = vmatpush1.msra.mxu0 0.0
        %954 = vmatprep.subr.mxu0 0.0
        %955 = vmatpush1.msra.mxu0 0.0
        %956 = vmatprep.subr.mxu0 0.0
        %957 = vmatpush1.msra.mxu0 0.0
        %958 = vmatprep.subr.mxu0 0.0
        %959 = vmatpush1.msra.mxu0 0.0
        %960 = vmatprep.subr.mxu0 0.0
        %961 = vmatpush1.msra.mxu0 0.0
        %962 = vmatprep.subr.mxu0 0.0
        %963 = vmatpush1.msra.mxu0 0.0
        %964 = vmatprep.subr.mxu0 0.0
        %965 = vmatpush1.msra.mxu0 0.0
        %966 = vmatprep.subr.mxu0 0.0
        %967 = vmatpush1.msra.mxu0 0.0
        %968 = vmatprep.subr.mxu0 0.0
        %969 = vmatpush1.msra.mxu0 0.0
        %970 = vmatprep.subr.mxu0 0.0
        %971 = vmatpush1.msra.mxu0 0.0
        %972 = vmatprep.subr.mxu0 0.0
        %973 = vmatpush1.msra.mxu0 0.0
        %974 = vmatprep.subr.mxu0 0.0
        %975 = vmatpush1.msra.mxu0 0.0
        %976 = vmatprep.subr.mxu0 0.0
        %977 = vmatpush1.msra.mxu0 0.0
        %978 = vmatprep.subr.mxu0 0.0
        %979 = vmatpush1.msra.mxu0 0.0
        %980 = vmatprep.subr.mxu0 0.0
        %981 = vmatpush1.msra.mxu0 0.0
        %982 = vmatprep.subr.mxu0 0.0
        %983 = vmatpush1.msra.mxu0 0.0
        %984 = vmatprep.subr.mxu0 0.0
        %985 = vmatpush1.msra.mxu0 0.0
        %986 = vmatprep.subr.mxu0 0.0
        %987 = vmatpush1.msra.mxu0 0.0
        %988 = vmatprep.subr.mxu0 0.0
        %989 = vmatpush1.msra.mxu0 0.0
        %990 = vmatprep.subr.mxu0 0.0
        %991 = vmatpush1.msra.mxu0 0.0
        %992 = vmatprep.subr.mxu0 0.0
        %993 = vmatpush1.msra.mxu0 0.0
        %994 = vmatprep.subr.mxu0 0.0
        %995 = vmatpush1.msra.mxu0 0.0
        %996 = vmatprep.subr.mxu0 0.0
        %997 = vmatpush1.msra.mxu0 0.0
        %998 = vmatprep.mubr.f32.mxu0 0.0
        %999 = vmatmul.mubr.f32.gmra.mrb[0].mxu0 %v887
        %v1000 = vpop.f32.mrb[0].mxu0
        %v1001 = vadd.f32 0.0, %v1000
        %v1002 = vpop.f32.mrb[0].mxu0
        %v1003 = vadd.f32 0.0, %v1002
        %1004 = vmatprep.mubr.f32.mxu0 0.0
        %1005 = vmatmul.mubr.f32.gmra.mrb[0].mxu0 %v890
        %v1006 = vpop.f32.mrb[0].mxu0
        %v1007 = vadd.f32 0.0, %v1006
        %v1008 = vpop.f32.mrb[0].mxu0
        %v1009 = vadd.f32 0.0, %v1008
        %1010 = vmatprep.mubr.f32.mxu0 0.0
        %1011 = vmatmul.mubr.f32.gmra.mrb[0].mxu0 %v893
        %v1012 = vpop.f32.mrb[0].mxu0
        %v1013 = vadd.f32 0.0, %v1012
        %v1014 = vpop.f32.mrb[0].mxu0
        %v1015 = vadd.f32 0.0, %v1014
        %1016 = vmatprep.mubr.f32.mxu0 0.0
        %1017 = vmatmul.mubr.f32.gmra.mrb[0].mxu0 %v896
        %v1018 = vpop.f32.mrb[0].mxu0
        %v1019 = vadd.f32 0.0, %v1018
        %v1020 = vpop.f32.mrb[0].mxu0
        %v1021 = vadd.f32 0.0, %v1020
        %1022 = vmatprep.mubr.f32.mxu0 0.0
        %1023 = vmatmul.mubr.f32.gmra.mrb[0].mxu0 %v899
        %v1024 = vpop.f32.mrb[0].mxu0
        %v1025 = vadd.f32 0.0, %v1024
        %v1026 = vpop.f32.mrb[0].mxu0
        %v1027 = vadd.f32 0.0, %v1026
        %1028 = vmatprep.mubr.f32.mxu0 0.0
        %1029 = vmatmul.mubr.f32.gmra.mrb[0].mxu0 %v902
        %v1030 = vpop.f32.mrb[0].mxu0
        %v1031 = vadd.f32 0.0, %v1030
        %v1032 = vpop.f32.mrb[0].mxu0
        %v1033 = vadd.f32 0.0, %v1032
        %1034 = vmatprep.mubr.f32.mxu0 0.0
        %1035 = vmatmul.mubr.f32.gmra.mrb[0].mxu0 %v905
        %v1036 = vpop.f32.mrb[0].mxu0
        %v1037 = vadd.f32 0.0, %v1036
        %v1038 = vpop.f32.mrb[0].mxu0
        %v1039 = vadd.f32 0.0, %v1038
        %1040 = vmatprep.mubr.f32.mxu0 0.0
        %1041 = vmatmul.mubr.f32.gmra.mrb[0].mxu0 %v908
        %v1042 = vpop.f32.mrb[0].mxu0
        %v1043 = vadd.f32 0.0, %v1042
        %v1044 = vpop.f32.mrb[0].mxu0
        %v1045 = vadd.f32 0.0, %v1044
        %1046 = vmatprep.mubr.f32.mxu0 0.0
        %1047 = vmatmul.mubr.f32.gmra.mrb[0].mxu0 %v911
        %v1048 = vpop.f32.mrb[0].mxu0
        %v1049 = vadd.f32 0.0, %v1048
        %v1050 = vpop.f32.mrb[0].mxu0
        %v1051 = vadd.f32 0.0, %v1050
        %1052 = vmatprep.mubr.f32.mxu0 0.0
        %1053 = vmatmul.mubr.f32.gmra.mrb[0].mxu0 %v914
        %v1054 = vpop.f32.mrb[0].mxu0
        %v1055 = vadd.f32 0.0, %v1054
        %v1056 = vpop.f32.mrb[0].mxu0
        %v1057 = vadd.f32 0.0, %v1056
        %1058 = vmatprep.mubr.f32.mxu0 0.0
        %1059 = vmatmul.mubr.f32.gmra.mrb[0].mxu0 %v917
        %v1060 = vpop.f32.mrb[0].mxu0
        %v1061 = vadd.f32 0.0, %v1060
        %v1062 = vpop.f32.mrb[0].mxu0
        %v1063 = vadd.f32 0.0, %v1062
        %1064 = vmatprep.mubr.f32.mxu0 0.0
        %1065 = vmatmul.mubr.f32.gmra.mrb[0].mxu0 %v920
        %v1066 = vpop.f32.mrb[0].mxu0
        %v1067 = vadd.f32 0.0, %v1066
        %v1068 = vpop.f32.mrb[0].mxu0
        %v1069 = vadd.f32 0.0, %v1068
        %1070 = vmatprep.mubr.f32.mxu0 0.0
        %1071 = vmatmul.mubr.f32.gmra.mrb[0].mxu0 %v923
        %v1072 = vpop.f32.mrb[0].mxu0
        %v1073 = vadd.f32 0.0, %v1072
        %v1074 = vpop.f32.mrb[0].mxu0
        %v1075 = vadd.f32 0.0, %v1074
        %1076 = vmatprep.mubr.f32.mxu0 0.0
        %1077 = vmatmul.mubr.f32.gmra.mrb[0].mxu0 %v926
        %v1078 = vpop.f32.mrb[0].mxu0
        %v1079 = vadd.f32 0.0, %v1078
        %v1080 = vpop.f32.mrb[0].mxu0
        %v1081 = vadd.f32 0.0, %v1080
        %1082 = vmatprep.mubr.f32.mxu0 0.0
        %1083 = vmatmul.mubr.f32.gmra.mrb[0].mxu0 %v929
        %v1084 = vpop.f32.mrb[0].mxu0
        %v1085 = vadd.f32 0.0, %v1084
        %v1086 = vpop.f32.mrb[0].mxu0
        %v1087 = vadd.f32 0.0, %v1086
        %1088 = vmatprep.mubr.f32.mxu0 0.0
        %1089 = vmatmul.mubr.f32.gmra.mrb[0].mxu0 %v932
        %v1090 = vpop.f32.mrb[0].mxu0
        %v1091 = vadd.f32 0.0, %v1090
        %v1092 = vpop.f32.mrb[0].mxu0
        %v1093 = vadd.f32 0.0, %v1092
        %1094 = vdwg.mxu0
        %v1095 = vmax.f32 %v1001, %v1003
        %1096 = vmax.xlane.f32.xlu0 %v1095
        %v1097 = vpop.xlane.xlu0 %1096
        %v1098 = vmax.f32 %v1007, %v1009
        %1099 = vmax.xlane.f32.xlu0 %v1098
        %v1100 = vpop.xlane.xlu0 %1099
        %v1101 = vmax.f32 %v1013, %v1015
        %1102 = vmax.xlane.f32.xlu0 %v1101
        %v1103 = vpop.xlane.xlu0 %1102
        %v1104 = vmax.f32 %v1019, %v1021
        %1105 = vmax.xlane.f32.xlu0 %v1104
        %v1106 = vpop.xlane.xlu0 %1105
        %v1107 = vmax.f32 %v1025, %v1027
        %1108 = vmax.xlane.f32.xlu0 %v1107
        %v1109 = vpop.xlane.xlu0 %1108
        %v1110 = vmax.f32 %v1031, %v1033
        %1111 = vmax.xlane.f32.xlu0 %v1110
        %v1112 = vpop.xlane.xlu0 %1111
        %v1113 = vmax.f32 %v1037, %v1039
        %1114 = vmax.xlane.f32.xlu0 %v1113
        %v1115 = vpop.xlane.xlu0 %1114
        %v1116 = vmax.f32 %v1043, %v1045
        %1117 = vmax.xlane.f32.xlu0 %v1116
        %v1118 = vpop.xlane.xlu0 %1117
        %v1119 = vmax.f32 %v1049, %v1051
        %1120 = vmax.xlane.f32.xlu0 %v1119
        %v1121 = vpop.xlane.xlu0 %1120
        %v1122 = vmax.f32 %v1055, %v1057
        %1123 = vmax.xlane.f32.xlu0 %v1122
        %v1124 = vpop.xlane.xlu0 %1123
        %v1125 = vmax.f32 %v1061, %v1063
        %1126 = vmax.xlane.f32.xlu0 %v1125
        %v1127 = vpop.xlane.xlu0 %1126
        %v1128 = vmax.f32 %v1067, %v1069
        %1129 = vmax.xlane.f32.xlu0 %v1128
        %v1130 = vpop.xlane.xlu0 %1129
        %v1131 = vmax.f32 %v1073, %v1075
        %1132 = vmax.xlane.f32.xlu0 %v1131
        %v1133 = vpop.xlane.xlu0 %1132
        %v1134 = vmax.f32 %v1079, %v1081
        %1135 = vmax.xlane.f32.xlu0 %v1134
        %v1136 = vpop.xlane.xlu0 %1135
        %v1137 = vmax.f32 %v1085, %v1087
        %1138 = vmax.xlane.f32.xlu0 %v1137
        %v1139 = vpop.xlane.xlu0 %1138
        %v1140 = vmax.f32 %v1091, %v1093
        %1141 = vmax.xlane.f32.xlu0 %v1140
        %v1142 = vpop.xlane.xlu0 %1141
        %v1143 = vsub.f32 %v1001, %v1097
        %v1144 = vsub.f32 %v1003, %v1097
        %v1145 = vsub.f32 %v1007, %v1100
        %v1146 = vsub.f32 %v1009, %v1100
        %v1147 = vsub.f32 %v1013, %v1103
        %v1148 = vsub.f32 %v1015, %v1103
        %v1149 = vsub.f32 %v1019, %v1106
        %v1150 = vsub.f32 %v1021, %v1106
        %v1151 = vsub.f32 %v1025, %v1109
        %v1152 = vsub.f32 %v1027, %v1109
        %v1153 = vsub.f32 %v1031, %v1112
        %v1154 = vsub.f32 %v1033, %v1112
        %v1155 = vsub.f32 %v1037, %v1115
        %v1156 = vsub.f32 %v1039, %v1115
        %v1157 = vsub.f32 %v1043, %v1118
        %v1158 = vsub.f32 %v1045, %v1118
        %v1159 = vsub.f32 %v1049, %v1121
        %v1160 = vsub.f32 %v1051, %v1121
        %v1161 = vsub.f32 %v1055, %v1124
        %v1162 = vsub.f32 %v1057, %v1124
        %v1163 = vsub.f32 %v1061, %v1127
        %v1164 = vsub.f32 %v1063, %v1127
        %v1165 = vsub.f32 %v1067, %v1130
        %v1166 = vsub.f32 %v1069, %v1130
        %v1167 = vsub.f32 %v1073, %v1133
        %v1168 = vsub.f32 %v1075, %v1133
        %v1169 = vsub.f32 %v1079, %v1136
        %v1170 = vsub.f32 %v1081, %v1136
        %v1171 = vsub.f32 %v1085, %v1139
        %v1172 = vsub.f32 %v1087, %v1139
        %v1173 = vsub.f32 %v1091, %v1142
        %v1174 = vsub.f32 %v1093, %v1142
        %v1175 = vmul.f32 %v1143, 1.442695
        %v1176 = vpow.pop %v1175
        %v1177 = vmul.f32 %v1144, 1.442695
        %v1178 = vpow.pop %v1177
        %v1179 = vmul.f32 %v1145, 1.442695
        %v1180 = vpow.pop %v1179
        %v1181 = vmul.f32 %v1146, 1.442695
        %v1182 = vpow.pop %v1181
        %v1183 = vmul.f32 %v1147, 1.442695
        %v1184 = vpow.pop %v1183
        %v1185 = vmul.f32 %v1148, 1.442695
        %v1186 = vpow.pop %v1185
        %v1187 = vmul.f32 %v1149, 1.442695
        %v1188 = vpow.pop %v1187
        %v1189 = vmul.f32 %v1150, 1.442695
        %v1190 = vpow.pop %v1189
        %v1191 = vmul.f32 %v1151, 1.442695
        %v1192 = vpow.pop %v1191
        %v1193 = vmul.f32 %v1152, 1.442695
        %v1194 = vpow.pop %v1193
        %v1195 = vmul.f32 %v1153, 1.442695
        %v1196 = vpow.pop %v1195
        %v1197 = vmul.f32 %v1154, 1.442695
        %v1198 = vpow.pop %v1197
        %v1199 = vmul.f32 %v1155, 1.442695
        %v1200 = vpow.pop %v1199
        %v1201 = vmul.f32 %v1156, 1.442695
        %v1202 = vpow.pop %v1201
        %v1203 = vmul.f32 %v1157, 1.442695
        %v1204 = vpow.pop %v1203
        %v1205 = vmul.f32 %v1158, 1.442695
        %v1206 = vpow.pop %v1205
        %v1207 = vmul.f32 %v1159, 1.442695
        %v1208 = vpow.pop %v1207
        %v1209 = vmul.f32 %v1160, 1.442695
        %v1210 = vpow.pop %v1209
        %v1211 = vmul.f32 %v1161, 1.442695
        %v1212 = vpow.pop %v1211
        %v1213 = vmul.f32 %v1162, 1.442695
        %v1214 = vpow.pop %v1213
        %v1215 = vmul.f32 %v1163, 1.442695
        %v1216 = vpow.pop %v1215
        %v1217 = vmul.f32 %v1164, 1.442695
        %v1218 = vpow.pop %v1217
        %v1219 = vmul.f32 %v1165, 1.442695
        %v1220 = vpow.pop %v1219
        %v1221 = vmul.f32 %v1166, 1.442695
        %v1222 = vpow.pop %v1221
        %v1223 = vmul.f32 %v1167, 1.442695
        %v1224 = vpow.pop %v1223
        %v1225 = vmul.f32 %v1168, 1.442695
        %v1226 = vpow.pop %v1225
        %v1227 = vmul.f32 %v1169, 1.442695
        %v1228 = vpow.pop %v1227
        %v1229 = vmul.f32 %v1170, 1.442695
        %v1230 = vpow.pop %v1229
        %v1231 = vmul.f32 %v1171, 1.442695
        %v1232 = vpow.pop %v1231
        %v1233 = vmul.f32 %v1172, 1.442695
        %v1234 = vpow.pop %v1233
        %v1235 = vmul.f32 %v1173, 1.442695
        %v1236 = vpow.pop %v1235
        %v1237 = vmul.f32 %v1174, 1.442695
        %v1238 = vpow.pop %v1237
        %v1239 = vadd.f32 %v1176, %v1178
        %1240 = vadd.xlane.f32.xlu0 %v1239
        %v1241 = vpop.xlane.xlu0 %1240
        %v1242 = vadd.f32 %v1180, %v1182
        %1243 = vadd.xlane.f32.xlu0 %v1242
        %v1244 = vpop.xlane.xlu0 %1243
        %v1245 = vadd.f32 %v1184, %v1186
        %1246 = vadd.xlane.f32.xlu0 %v1245
        %v1247 = vpop.xlane.xlu0 %1246
        %v1248 = vadd.f32 %v1188, %v1190
        %1249 = vadd.xlane.f32.xlu0 %v1248
        %v1250 = vpop.xlane.xlu0 %1249
        %v1251 = vadd.f32 %v1192, %v1194
        %1252 = vadd.xlane.f32.xlu0 %v1251
        %v1253 = vpop.xlane.xlu0 %1252
        %v1254 = vadd.f32 %v1196, %v1198
        %1255 = vadd.xlane.f32.xlu0 %v1254
        %v1256 = vpop.xlane.xlu0 %1255
        %v1257 = vadd.f32 %v1200, %v1202
        %1258 = vadd.xlane.f32.xlu0 %v1257
        %v1259 = vpop.xlane.xlu0 %1258
        %v1260 = vadd.f32 %v1204, %v1206
        %1261 = vadd.xlane.f32.xlu0 %v1260
        %v1262 = vpop.xlane.xlu0 %1261
        %v1263 = vadd.f32 %v1208, %v1210
        %1264 = vadd.xlane.f32.xlu0 %v1263
        %v1265 = vpop.xlane.xlu0 %1264
        %v1266 = vadd.f32 %v1212, %v1214
        %1267 = vadd.xlane.f32.xlu0 %v1266
        %v1268 = vpop.xlane.xlu0 %1267
        %v1269 = vadd.f32 %v1216, %v1218
        %1270 = vadd.xlane.f32.xlu0 %v1269
        %v1271 = vpop.xlane.xlu0 %1270
        %v1272 = vadd.f32 %v1220, %v1222
        %1273 = vadd.xlane.f32.xlu0 %v1272
        %v1274 = vpop.xlane.xlu0 %1273
        %v1275 = vadd.f32 %v1224, %v1226
        %1276 = vadd.xlane.f32.xlu0 %v1275
        %v1277 = vpop.xlane.xlu0 %1276
        %v1278 = vadd.f32 %v1228, %v1230
        %1279 = vadd.xlane.f32.xlu0 %v1278
        %v1280 = vpop.xlane.xlu0 %1279
        %v1281 = vadd.f32 %v1232, %v1234
        %1282 = vadd.xlane.f32.xlu0 %v1281
        %v1283 = vpop.xlane.xlu0 %1282
        %v1284 = vadd.f32 %v1236, %v1238
        %1285 = vadd.xlane.f32.xlu0 %v1284
        %v1286 = vpop.xlane.xlu0 %1285
        %v1287 = vrcp.pop %v1241
        %v1288 = vrcp.pop %v1244
        %v1289 = vrcp.pop %v1247
        %v1290 = vrcp.pop %v1250
        %v1291 = vrcp.pop %v1253
        %v1292 = vrcp.pop %v1256
        %v1293 = vrcp.pop %v1259
        %v1294 = vrcp.pop %v1262
        %v1295 = vrcp.pop %v1265
        %v1296 = vrcp.pop %v1268
        %v1297 = vrcp.pop %v1271
        %v1298 = vrcp.pop %v1274
        %v1299 = vrcp.pop %v1277
        %v1300 = vrcp.pop %v1280
        %v1301 = vrcp.pop %v1283
        %v1302 = vrcp.pop %v1286
        %v1303 = vmul.f32 %v1176, %v1287
        %v1304 = vmul.f32 %v1178, %v1287
        %v1305 = vmul.f32 %v1180, %v1288
        %v1306 = vmul.f32 %v1182, %v1288
        %v1307 = vmul.f32 %v1184, %v1289
        %v1308 = vmul.f32 %v1186, %v1289
        %v1309 = vmul.f32 %v1188, %v1290
        %v1310 = vmul.f32 %v1190, %v1290
        %v1311 = vmul.f32 %v1192, %v1291
        %v1312 = vmul.f32 %v1194, %v1291
        %v1313 = vmul.f32 %v1196, %v1292
        %v1314 = vmul.f32 %v1198, %v1292
        %v1315 = vmul.f32 %v1200, %v1293
        %v1316 = vmul.f32 %v1202, %v1293
        %v1317 = vmul.f32 %v1204, %v1294
        %v1318 = vmul.f32 %v1206, %v1294
        %v1319 = vmul.f32 %v1208, %v1295
        %v1320 = vmul.f32 %v1210, %v1295
        %v1321 = vmul.f32 %v1212, %v1296
        %v1322 = vmul.f32 %v1214, %v1296
        %v1323 = vmul.f32 %v1216, %v1297
        %v1324 = vmul.f32 %v1218, %v1297
        %v1325 = vmul.f32 %v1220, %v1298
        %v1326 = vmul.f32 %v1222, %v1298
        %v1327 = vmul.f32 %v1224, %v1299
        %v1328 = vmul.f32 %v1226, %v1299
        %v1329 = vmul.f32 %v1228, %v1300
        %v1330 = vmul.f32 %v1230, %v1300
        %v1331 = vmul.f32 %v1232, %v1301
        %v1332 = vmul.f32 %v1234, %v1301
        %v1333 = vmul.f32 %v1236, %v1302
        %v1334 = vmul.f32 %v1238, %v1302
        %1335 = vmatprep.subr.mxu0 %v1304
        %1336 = vmatpush1.msra.mxu0 %v1303
        %1337 = vmatprep.subr.mxu0 %v1306
        %1338 = vmatpush1.msra.mxu0 %v1305
        %1339 = vmatprep.subr.mxu0 %v1308
        %1340 = vmatpush1.msra.mxu0 %v1307
        %1341 = vmatprep.subr.mxu0 %v1310
        %1342 = vmatpush1.msra.mxu0 %v1309
        %1343 = vmatprep.subr.mxu0 %v1312
        %1344 = vmatpush1.msra.mxu0 %v1311
        %1345 = vmatprep.subr.mxu0 %v1314
        %1346 = vmatpush1.msra.mxu0 %v1313
        %1347 = vmatprep.subr.mxu0 %v1316
        %1348 = vmatpush1.msra.mxu0 %v1315
        %1349 = vmatprep.subr.mxu0 %v1318
        %1350 = vmatpush1.msra.mxu0 %v1317
        %1351 = vmatprep.subr.mxu0 %v1320
        %1352 = vmatpush1.msra.mxu0 %v1319
        %1353 = vmatprep.subr.mxu0 %v1322
        %1354 = vmatpush1.msra.mxu0 %v1321
        %1355 = vmatprep.subr.mxu0 %v1324
        %1356 = vmatpush1.msra.mxu0 %v1323
        %1357 = vmatprep.subr.mxu0 %v1326
        %1358 = vmatpush1.msra.mxu0 %v1325
        %1359 = vmatprep.subr.mxu0 %v1328
        %1360 = vmatpush1.msra.mxu0 %v1327
        %1361 = vmatprep.subr.mxu0 %v1330
        %1362 = vmatpush1.msra.mxu0 %v1329
        %1363 = vmatprep.subr.mxu0 %v1332
        %1364 = vmatpush1.msra.mxu0 %v1331
        %1365 = vmatprep.subr.mxu0 %v1334
        %1366 = vmatpush1.msra.mxu0 %v1333
        %1367 = vmatprep.subr.mxu0 0.0
        %1368 = vmatpush1.msra.mxu0 0.0
        %1369 = vmatprep.subr.mxu0 0.0
        %1370 = vmatpush1.msra.mxu0 0.0
        %1371 = vmatprep.subr.mxu0 0.0
        %1372 = vmatpush1.msra.mxu0 0.0
        %1373 = vmatprep.subr.mxu0 0.0
        %1374 = vmatpush1.msra.mxu0 0.0
        %1375 = vmatprep.subr.mxu0 0.0
        %1376 = vmatpush1.msra.mxu0 0.0
        %1377 = vmatprep.subr.mxu0 0.0
        %1378 = vmatpush1.msra.mxu0 0.0
        %1379 = vmatprep.subr.mxu0 0.0
        %1380 = vmatpush1.msra.mxu0 0.0
        %1381 = vmatprep.subr.mxu0 0.0
        %1382 = vmatpush1.msra.mxu0 0.0
        %1383 = vmatprep.subr.mxu0 0.0
        %1384 = vmatpush1.msra.mxu0 0.0
        %1385 = vmatprep.subr.mxu0 0.0
        %1386 = vmatpush1.msra.mxu0 0.0
        %1387 = vmatprep.subr.mxu0 0.0
        %1388 = vmatpush1.msra.mxu0 0.0
        %1389 = vmatprep.subr.mxu0 0.0
        %1390 = vmatpush1.msra.mxu0 0.0
        %1391 = vmatprep.subr.mxu0 0.0
        %1392 = vmatpush1.msra.mxu0 0.0
        %1393 = vmatprep.subr.mxu0 0.0
        %1394 = vmatpush1.msra.mxu0 0.0
        %1395 = vmatprep.subr.mxu0 0.0
        %1396 = vmatpush1.msra.mxu0 0.0
        %1397 = vmatprep.subr.mxu0 0.0
        %1398 = vmatpush1.msra.mxu0 0.0
        %1399 = vmatprep.mubr.f32.mxu0 0.0
        %1400 = vmatmul.mubr.f32.gmra.mrb[0].mxu0 %v850
        %v1401 = vpop.f32.mrb[0].mxu0
        %v1402 = vadd.f32 0.0, %v1401
        %v1403 = vpop.f32.mrb[0].mxu0
        %v1404 = vadd.f32 0.0, %v1403
        %1405 = vmatprep.mubr.f32.mxu0 0.0
        %1406 = vmatmul.mubr.f32.gmra.mrb[0].mxu0 %v851
        %v1407 = vpop.f32.mrb[0].mxu0
        %v1408 = vadd.f32 0.0, %v1407
        %v1409 = vpop.f32.mrb[0].mxu0
        %v1410 = vadd.f32 0.0, %v1409
        %1411 = vmatprep.mubr.f32.mxu0 0.0
        %1412 = vmatmul.mubr.f32.gmra.mrb[0].mxu0 %v852
        %v1413 = vpop.f32.mrb[0].mxu0
        %v1414 = vadd.f32 0.0, %v1413
        %v1415 = vpop.f32.mrb[0].mxu0
        %v1416 = vadd.f32 0.0, %v1415
        %1417 = vmatprep.mubr.f32.mxu0 0.0
        %1418 = vmatmul.mubr.f32.gmra.mrb[0].mxu0 %v853
        %v1419 = vpop.f32.mrb[0].mxu0
        %v1420 = vadd.f32 0.0, %v1419
        %v1421 = vpop.f32.mrb[0].mxu0
        %v1422 = vadd.f32 0.0, %v1421
        %1423 = vdwg.mxu0
        %1424 = vmatprep.subr.mxu0 %v818
        %1425 = vmatpush1.msra.mxu0 %v817
        %1426 = vmatprep.subr.mxu0 %v820
        %1427 = vmatpush1.msra.mxu0 %v819
        %1428 = vmatprep.subr.mxu0 %v822
        %1429 = vmatpush1.msra.mxu0 %v821
        %1430 = vmatprep.subr.mxu0 %v824
        %1431 = vmatpush1.msra.mxu0 %v823
        %1432 = vmatprep.subr.mxu0 %v826
        %1433 = vmatpush1.msra.mxu0 %v825
        %1434 = vmatprep.subr.mxu0 %v828
        %1435 = vmatpush1.msra.mxu0 %v827
        %1436 = vmatprep.subr.mxu0 %v830
        %1437 = vmatpush1.msra.mxu0 %v829
        %1438 = vmatprep.subr.mxu0 %v832
        %1439 = vmatpush1.msra.mxu0 %v831
        %1440 = vmatprep.subr.mxu0 %v834
        %1441 = vmatpush1.msra.mxu0 %v833
        %1442 = vmatprep.subr.mxu0 %v836
        %1443 = vmatpush1.msra.mxu0 %v835
        %1444 = vmatprep.subr.mxu0 %v838
        %1445 = vmatpush1.msra.mxu0 %v837
        %1446 = vmatprep.subr.mxu0 %v840
        %1447 = vmatpush1.msra.mxu0 %v839
        %1448 = vmatprep.subr.mxu0 %v842
        %1449 = vmatpush1.msra.mxu0 %v841
        %1450 = vmatprep.subr.mxu0 %v844
        %1451 = vmatpush1.msra.mxu0 %v843
        %1452 = vmatprep.subr.mxu0 %v846
        %1453 = vmatpush1.msra.mxu0 %v845
        %1454 = vmatprep.subr.mxu0 %v848
        %1455 = vmatpush1.msra.mxu0 %v847
        %1456 = vmatprep.subr.mxu0 0.0
        %1457 = vmatpush1.msra.mxu0 0.0
        %1458 = vmatprep.subr.mxu0 0.0
        %1459 = vmatpush1.msra.mxu0 0.0
        %1460 = vmatprep.subr.mxu0 0.0
        %1461 = vmatpush1.msra.mxu0 0.0
        %1462 = vmatprep.subr.mxu0 0.0
        %1463 = vmatpush1.msra.mxu0 0.0
        %1464 = vmatprep.subr.mxu0 0.0
        %1465 = vmatpush1.msra.mxu0 0.0
        %1466 = vmatprep.subr.mxu0 0.0
        %1467 = vmatpush1.msra.mxu0 0.0
        %1468 = vmatprep.subr.mxu0 0.0
        %1469 = vmatpush1.msra.mxu0 0.0
        %1470 = vmatprep.subr.mxu0 0.0
        %1471 = vmatpush1.msra.mxu0 0.0
        %1472 = vmatprep.subr.mxu0 0.0
        %1473 = vmatpush1.msra.mxu0 0.0
        %1474 = vmatprep.subr.mxu0 0.0
        %1475 = vmatpush1.msra.mxu0 0.0
        %1476 = vmatprep.subr.mxu0 0.0
        %1477 = vmatpush1.msra.mxu0 0.0
        %1478 = vmatprep.subr.mxu0 0.0
        %1479 = vmatpush1.msra.mxu0 0.0
        %1480 = vmatprep.subr.mxu0 0.0
        %1481 = vmatpush1.msra.mxu0 0.0
        %1482 = vmatprep.subr.mxu0 0.0
        %1483 = vmatpush1.msra.mxu0 0.0
        %1484 = vmatprep.subr.mxu0 0.0
        %1485 = vmatpush1.msra.mxu0 0.0
        %1486 = vmatprep.subr.mxu0 0.0
        %1487 = vmatpush1.msra.mxu0 0.0
        %1488 = vmatprep.mubr.f32.mxu0 0.0
        %1489 = vmatmul.mubr.f32.gmra.mrb[0].mxu0 %v364
        %v1490 = vpop.f32.mrb[0].mxu0
        %v1491 = vadd.f32 %v1402, %v1490
        %v1492 = vpop.f32.mrb[0].mxu0
        %v1493 = vadd.f32 %v1404, %v1492
        %1494 = vmatprep.mubr.f32.mxu0 0.0
        %1495 = vmatmul.mubr.f32.gmra.mrb[0].mxu0 %v365
        %v1496 = vpop.f32.mrb[0].mxu0
        %v1497 = vadd.f32 %v1408, %v1496
        %v1498 = vpop.f32.mrb[0].mxu0
        %v1499 = vadd.f32 %v1410, %v1498
        %1500 = vmatprep.mubr.f32.mxu0 0.0
        %1501 = vmatmul.mubr.f32.gmra.mrb[0].mxu0 %v366
        %v1502 = vpop.f32.mrb[0].mxu0
        %v1503 = vadd.f32 %v1414, %v1502
        %v1504 = vpop.f32.mrb[0].mxu0
        %v1505 = vadd.f32 %v1416, %v1504
        %1506 = vmatprep.mubr.f32.mxu0 0.0
        %1507 = vmatmul.mubr.f32.gmra.mrb[0].mxu0 %v367
        %v1508 = vpop.f32.mrb[0].mxu0
        %v1509 = vadd.f32 %v1420, %v1508
        %v1510 = vpop.f32.mrb[0].mxu0
        %v1511 = vadd.f32 %v1422, %v1510
        %1512 = vdwg.mxu0
        %v1514 = vsel %vm262, %v258, 0
        %v1517 = vsel %vm262, %v259, 0
        %v1520 = vsel %vm262, %v260, 0
        %v1523 = vsel %vm262, %v261, 0
        %1525 = vmatprep.subr.mxu0 %v1493
        %1526 = vmatpush1.msra.mxu0 %v1491
        %1527 = vmatprep.subr.mxu0 %v1499
        %1528 = vmatpush1.msra.mxu0 %v1497
        %1529 = vmatprep.subr.mxu0 %v1505
        %1530 = vmatpush1.msra.mxu0 %v1503
        %1531 = vmatprep.subr.mxu0 %v1511
        %1532 = vmatpush1.msra.mxu0 %v1509
        %1533 = vmatprep.subr.mxu0 0.0
        %1534 = vmatpush1.msra.mxu0 0.0
        %1535 = vmatprep.subr.mxu0 0.0
        %1536 = vmatpush1.msra.mxu0 0.0
        %1537 = vmatprep.subr.mxu0 0.0
        %1538 = vmatpush1.msra.mxu0 0.0
        %1539 = vmatprep.subr.mxu0 0.0
        %1540 = vmatpush1.msra.mxu0 0.0
        %1541 = vmatprep.subr.mxu0 0.0
        %1542 = vmatpush1.msra.mxu0 0.0
        %1543 = vmatprep.subr.mxu0 0.0
        %1544 = vmatpush1.msra.mxu0 0.0
        %1545 = vmatprep.subr.mxu0 0.0
        %1546 = vmatpush1.msra.mxu0 0.0
        %1547 = vmatprep.subr.mxu0 0.0
        %1548 = vmatpush1.msra.mxu0 0.0
        %1549 = vmatprep.subr.mxu0 0.0
        %1550 = vmatpush1.msra.mxu0 0.0
        %1551 = vmatprep.subr.mxu0 0.0
        %1552 = vmatpush1.msra.mxu0 0.0
        %1553 = vmatprep.subr.mxu0 0.0
        %1554 = vmatpush1.msra.mxu0 0.0
        %1555 = vmatprep.subr.mxu0 0.0
        %1556 = vmatpush1.msra.mxu0 0.0
        %1557 = vmatprep.subr.mxu0 0.0
        %1558 = vmatpush1.msra.mxu0 0.0
        %1559 = vmatprep.subr.mxu0 0.0
        %1560 = vmatpush1.msra.mxu0 0.0
        %1561 = vmatprep.subr.mxu0 0.0
        %1562 = vmatpush1.msra.mxu0 0.0
        %1563 = vmatprep.subr.mxu0 0.0
        %1564 = vmatpush1.msra.mxu0 0.0
        %1565 = vmatprep.subr.mxu0 0.0
        %1566 = vmatpush1.msra.mxu0 0.0
        %1567 = vmatprep.subr.mxu0 0.0
        %1568 = vmatpush1.msra.mxu0 0.0
        %1569 = vmatprep.subr.mxu0 0.0
        %1570 = vmatpush1.msra.mxu0 0.0
        %1571 = vmatprep.subr.mxu0 0.0
        %1572 = vmatpush1.msra.mxu0 0.0
        %1573 = vmatprep.subr.mxu0 0.0
        %1574 = vmatpush1.msra.mxu0 0.0
        %1575 = vmatprep.subr.mxu0 0.0
        %1576 = vmatpush1.msra.mxu0 0.0
        %1577 = vmatprep.subr.mxu0 0.0
        %1578 = vmatpush1.msra.mxu0 0.0
        %1579 = vmatprep.subr.mxu0 0.0
        %1580 = vmatpush1.msra.mxu0 0.0
        %1581 = vmatprep.subr.mxu0 0.0
        %1582 = vmatpush1.msra.mxu0 0.0
        %1583 = vmatprep.subr.mxu0 0.0
        %1584 = vmatpush1.msra.mxu0 0.0
        %1585 = vmatprep.subr.mxu0 0.0
        %1586 = vmatpush1.msra.mxu0 0.0
        %1587 = vmatprep.subr.mxu0 0.0
        %1588 = vmatpush1.msra.mxu0 0.0
        %1589 = vmatprep.mubr.f32.mxu0 0.0
        %1590 = vmatmul.mubr.f32.gmra.mrb[0].mxu0 %v1514
        %v1591 = vpop.f32.mrb[0].mxu0
        %v1592 = vadd.f32 0.0, %v1591
        %v1593 = vpop.f32.mrb[0].mxu0
        %v1594 = vadd.f32 0.0, %v1593
        %1595 = vmatprep.mubr.f32.mxu0 0.0
        %1596 = vmatmul.mubr.f32.gmra.mrb[0].mxu0 %v1517
        %v1597 = vpop.f32.mrb[0].mxu0
        %v1598 = vadd.f32 0.0, %v1597
        %v1599 = vpop.f32.mrb[0].mxu0
        %v1600 = vadd.f32 0.0, %v1599
        %1601 = vmatprep.mubr.f32.mxu0 0.0
        %1602 = vmatmul.mubr.f32.gmra.mrb[0].mxu0 %v1520
        %v1603 = vpop.f32.mrb[0].mxu0
        %v1604 = vadd.f32 0.0, %v1603
        %v1605 = vpop.f32.mrb[0].mxu0
        %v1606 = vadd.f32 0.0, %v1605
        %1607 = vmatprep.mubr.f32.mxu0 0.0
        %1608 = vmatmul.mubr.f32.gmra.mrb[0].mxu0 %v1523
        %v1609 = vpop.f32.mrb[0].mxu0
        %v1610 = vadd.f32 0.0, %v1609
        %v1611 = vpop.f32.mrb[0].mxu0
        %v1612 = vadd.f32 0.0, %v1611
        %1613 = vdwg.mxu0
        %s1614 = sld [smem:[#allocation2]]
        %v1615 = vstv %s1614
        %v1616 = vmul.f32 %v1615, %v1592
        %v1617 = vmul.f32 %v1615, %v1594
        %v1618 = vmul.f32 %v1615, %v1598
        %v1619 = vmul.f32 %v1615, %v1600
        %v1620 = vmul.f32 %v1615, %v1604
        %v1621 = vmul.f32 %v1615, %v1606
        %v1622 = vmul.f32 %v1615, %v1610
        %v1623 = vmul.f32 %v1615, %v1612
        %v1624 = vadd.f32 %v1616, %v246
        %v1625 = vadd.f32 %v1617, %v247
        %v1626 = vadd.f32 %v1618, %v248
        %v1627 = vadd.f32 %v1619, %v249
        %v1628 = vadd.f32 %v1620, %v250
        %v1629 = vadd.f32 %v1621, %v251
        %v1630 = vadd.f32 %v1622, %v252
        %v1631 = vadd.f32 %v1623, %v253
        %1632 = vst [vmem:[%s245] sm:$0xff] %v1624
        %1633 = vst [vmem:[%s245 + $0x8] sm:$0xff] %v1625
        %1634 = vst [vmem:[%s245 + $0x10] sm:$0xff] %v1626
        %1635 = vst [vmem:[%s245 + $0x18] sm:$0xff] %v1627
        %1636 = vst [vmem:[%s245 + $0x20] sm:$0xff] %v1628
        %1637 = vst [vmem:[%s245 + $0x28] sm:$0xff] %v1629
        %1638 = vst [vmem:[%s245 + $0x30] sm:$0xff] %v1630
        %1639 = vst [vmem:[%s245 + $0x38] sm:$0xff] %v1631
        %s1640 = sand.u32 %s120, 1
        %s1641 = scalar_lea.sflag [#allocation5], %s1640
        %s1642 = sand.u32 %s120, 1
        %s1643 = smul.addr %s1642, 64
        %s1644 = scalar_lea.vmem [#allocation9], %s1643
        // Predicated region
        $region49: #{tpu_custom_call.1} parent=35 // pred_check
          %p1645 = pneg %p130
        $region50: #{tpu_custom_call.1} parent=35 // pred_check_branch
          %1647 = sbr.rel (%p1645) target = $region52
        $region51: #{tpu_custom_call.1} parent=35 // pred_region
          %s1649 = ssub.s32 1024, 1024
          %1650 = vsyncadd %s1641, %s1649
          %s1651 = smul.addr %s23, 8
          %s1652 = smul.addr %s1651, 128
          %s1653 = scalar_lea.hbm %s4, %s1652
          %s1654 = sshll.u32 %s1644, 4
          %s1655 = int_to_ptr.vmem [resolvable:$true] %s1654
          %1660 = dma.vmem_to_hbm [thread:$0]  %s1655, 1024, %s1653, %s1641, 256, 256, 16
        $region52: #{tpu_custom_call.1} parent=35 // pred_fallthru
          _
      $region36: #{tpu_custom_call.1} parent=5 // pred_fallthru
        _
      %p1661 = scmp.le.s32.totalorder 2, %s18
      // Predicated region
      $region53: #{tpu_custom_call.1} parent=5 // pred_check
        %p1662 = pneg %p1661
      $region54: #{tpu_custom_call.1} parent=5 // pred_check_branch
        %1664 = sbr.rel (%p1662) target = $region56
      $region55: #{tpu_custom_call.1} parent=5 // pred_region
        %s1665 = ssub.s32 %s18, 2
        // Predicated region
        $region57: #{tpu_custom_call.1} parent=55 // pred_check
          %p1666 = pneg %p136
        $region58: #{tpu_custom_call.1} parent=55 // pred_check_branch
          %1668 = sbr.rel (%p1666) target = $region60
        $region59: #{tpu_custom_call.1} parent=55 // pred_region
          %s1669 = sand.u32 %s121, 1
          %s1670 = scalar_lea.sflag [#allocation5], %s1669
          %s1671 = sand.u32 %s121, 1
          %s1672 = smul.addr %s1671, 64
          %s1673 = scalar_lea.vmem [#allocation9], %s1672
          %1674 = dma.done %s1670, 1024
        $region60: #{tpu_custom_call.1} parent=55 // pred_fallthru
          _
      $region56: #{tpu_custom_call.1} parent=5 // pred_fallthru
        _
    $region6: #{tpu_custom_call.1} parent=1 // loop_footer
      %s22 = sadd.s32 1, %s18
    $region7: #{tpu_custom_call.1} parent=1 // loop_footer_branch
      %17 = sbr.rel target = $region3
    $region8: #{tpu_custom_call.1} parent=1 // loop_exit
      _
    %1675 = vsyncpa [#allocation4], 1
    %s1676 = scalar_lea.sflag [#allocation4], 1
    %1677 = vsyncpa %s1676, 1
    %1678 = vsyncpa [#allocation7], 1
    %1679 = vsyncpa [#allocation5], 1
    %s1680 = scalar_lea.sflag [#allocation5], 1
    %1681 = vsyncpa %s1680, 1

</llo_original>
